<compile_context>
chip_gen: v5e
topology: v5e:2x2
jax: 0.10.0
libtpu: 0.0.40
codegen_flags: <defaults>
</compile_context>

<pallas_src>
import functools
import math

import jax
import jax.numpy as jnp
import numpy as np
from jax.experimental import pallas as pl
from jax.experimental.pallas import tpu as pltpu


# -----------------------------------------------------------------------------
# Fused kernel: out = x + ReLU(alpha * ((A_hat @ X_bf16) @ W + b))
# Grid = (row_tiles, max_nnz_col_blocks); reduction axis last.
# -----------------------------------------------------------------------------
def _fused_kernel(cols_ref, cnt_ref,                       # scalar prefetch (SMEM)
                  adj_ref, xk_ref, xres_ref, w_ref, b_ref, alpha_ref,
                  out_ref, acc_ref):
    i = pl.program_id(0)
    k = pl.program_id(1)

    @pl.when(k == 0)
    def _init():
        acc_ref[...] = jnp.zeros_like(acc_ref)

    # Only this row tile's real (non-padded) column blocks contribute.
    @pl.when(k < cnt_ref[i])
    def _accumulate():
        acc_ref[...] += jnp.dot(adj_ref[...], xk_ref[...],
                                preferred_element_type=jnp.float32)

    @pl.when(k == pl.num_programs(1) - 1)
    def _finalize():
        # Reassociated GCN: (A @ X) @ W  ==  A @ (X @ W); W is VMEM-resident.
        h = jnp.dot(acc_ref[...].astype(jnp.bfloat16), w_ref[...],
                    preferred_element_type=jnp.float32)
        h = h + b_ref[...]
        out_ref[...] = xres_ref[...] + jnp.maximum(alpha_ref[0] * h, 0.0)


# -----------------------------------------------------------------------------
# Jitted per-call stage (only x-dependent work happens here).
# -----------------------------------------------------------------------------
@functools.partial(jax.jit, static_argnames=("block_m", "block_k", "n_blocks"))
def drew_gnn_stage(x, adj_bf16, cols, cnt, w_pad_bf16, b_pad, alpha,
                   *, block_m, block_k, n_blocks):
    """One DRew GNN stage step: out = x + ReLU(alpha * (A_hat @ (x W) + b))."""
    n, d = x.shape
    n_pad = adj_bf16.shape[0]
    dp = w_pad_bf16.shape[0]
    mt = n_pad // block_m
    max_blocks = cols.shape[0] // mt            # static (from array shape)

    # Per-call x padding / bf16 cast (cheap, O(n * dp)).
    x_pad = jnp.zeros((n_pad, dp), jnp.float32).at[:n, :d].set(x)
    x_bf16 = x_pad.astype(jnp.bfloat16)

    # Scheduler hints: account only for the nonzero blocks actually streamed.
    flops = 2 * n_blocks * block_m * block_k * dp + 2 * n_pad * dp * dp
    bytes_accessed = (n_blocks * block_m * block_k * 2    # bf16 adjacency tiles
                      + n_blocks * block_k * dp * 2       # bf16 X panels (re-reads)
                      + n_pad * dp * 4                    # residual x
                      + n_pad * dp * 4                    # output
                      + dp * dp * 2 + dp * 4)             # W + b (resident)

    # VMEM budget: double-buffered streaming operands + resident acc/W/b.
    vmem_need = (2 * (block_m * block_k * 2               # adjacency tile
                      + block_k * dp * 2                  # X panel
                      + block_m * dp * 4                  # residual x tile
                      + block_m * dp * 4)                 # output tile
                 + block_m * dp * 4 + dp * dp * 2 + dp * 4)
    vmem_limit = int(min(max(2 * vmem_need, 32 * 1024 * 1024),
                         100 * 1024 * 1024))

    def adj_map(i, k, cols, cnt):
        return (i, cols[i * max_blocks + k])

    def xk_map(i, k, cols, cnt):
        return (cols[i * max_blocks + k], 0)

    grid_spec = pltpu.PrefetchScalarGridSpec(
        num_scalar_prefetch=2,                  # cols (1-D) + cnt in SMEM
        grid=(mt, max_blocks),
        in_specs=[
            pl.BlockSpec((block_m, block_k), adj_map),                   # A_hat tile
            pl.BlockSpec((block_k, dp), xk_map),                         # bf16 X panel
            pl.BlockSpec((block_m, dp), lambda i, k, cols, cnt: (i, 0)),  # residual x
            pl.BlockSpec((dp, dp), lambda i, k, cols, cnt: (0, 0)),       # W (resident)
            pl.BlockSpec((1, dp), lambda i, k, cols, cnt: (0, 0)),        # bias (resident)
            pl.BlockSpec(memory_space=pltpu.MemorySpace.SMEM),            # alpha scalar
        ],
        out_specs=pl.BlockSpec((block_m, dp), lambda i, k, cols, cnt: (i, 0)),
        scratch_shapes=[pltpu.VMEM((block_m, dp), jnp.float32)],
    )

    out_pad = pl.pallas_call(
        _fused_kernel,
        out_shape=jax.ShapeDtypeStruct((n_pad, dp), jnp.float32),
        grid_spec=grid_spec,
        compiler_params=pltpu.CompilerParams(
            dimension_semantics=("parallel", "arbitrary"),
            vmem_limit_bytes=vmem_limit),
        cost_estimate=pl.CostEstimate(
            flops=flops, transcendentals=0, bytes_accessed=bytes_accessed),
    )(cols, cnt, adj_bf16, x_bf16, x_pad, w_pad_bf16, b_pad, alpha)

    return out_pad[:n, :d]


# -----------------------------------------------------------------------------
# Graph-static preprocessing (hoisted out of the jitted path, done once).
# -----------------------------------------------------------------------------
def build_normalized_adjacency(edge_index, edge_attr, k, num_nodes):
    """Dense D^{-1/2} (A_k + I) D^{-1/2} for edges with edge_attr == k (numpy)."""
    edge_index = np.asarray(edge_index)
    edge_attr = np.asarray(edge_attr)
    mask = edge_attr == k
    src = edge_index[0][mask]
    dst = edge_index[1][mask]
    adj = np.zeros((num_nodes, num_nodes), np.float32)
    np.add.at(adj, (dst, src), 1.0)                      # row = dst, col = src
    adj += np.eye(num_nodes, dtype=np.float32)           # self loops
    deg = adj.sum(axis=1)
    d_inv_sqrt = np.where(deg > 0, 1.0 / np.sqrt(deg), 0.0).astype(np.float32)
    return adj * d_inv_sqrt[:, None] * d_inv_sqrt[None, :]


def prepare_graph(adj_norm, *, block_m, block_k):
    """Pad + bf16-cast adjacency and build per-row-tile nonzero block tables."""
    n = adj_norm.shape[0]
    align = math.lcm(block_m, block_k)
    n_pad = ((n + align - 1) // align) * align
    adj_pad = np.zeros((n_pad, n_pad), np.float32)
    adj_pad[:n, :n] = adj_norm

    mt = n_pad // block_m
    kt = n_pad // block_k
    blk_nnz = adj_pad.reshape(mt, block_m, kt, block_k).any(axis=(1, 3))
    cnt = blk_nnz.sum(axis=1).astype(np.int32)
    max_blocks = max(int(cnt.max()), 1)

    # Flattened 1-D (SMEM-padding friendly) column-block id list per row tile;
    # tail slots repeat the last valid id so the pipeline issues no extra DMA.
    cols = np.zeros((mt, max_blocks), np.int32)
    for i in range(mt):
        ids = np.nonzero(blk_nnz[i])[0].astype(np.int32)
        if ids.size == 0:
            ids = np.zeros((1,), np.int32)
        cols[i, :ids.size] = ids
        cols[i, ids.size:] = ids[-1]
    n_blocks = int(blk_nnz.sum())

    return (jnp.asarray(adj_pad, jnp.bfloat16),
            jnp.asarray(cols.reshape(-1)),
            jnp.asarray(cnt),
            n_blocks)


def prepare_params(w, b, *, dp):
    """Pad GCNConv weight/bias once (lane-dense dp); weight pre-cast to bf16."""
    d = np.asarray(w).shape[0]
    w_pad = np.zeros((dp, dp), np.float32)
    w_pad[:d, :d] = np.asarray(w)
    b_pad = np.zeros((1, dp), np.float32)
    b_pad[:, :d] = np.asarray(b).reshape(1, -1)
    return jnp.asarray(w_pad, jnp.bfloat16), jnp.asarray(b_pad)


# -----------------------------------------------------------------------------
# Demo / correctness check
# -----------------------------------------------------------------------------
if __name__ == "__main__":
    key = jax.random.PRNGKey(0)
    N = 1000   # nodes  -> pads to 1024: 4 row tiles of 256, 2 column blocks of 512
    D = 32     # dim_in == dim_out (residual requires equality); pads to 128

    BLOCK_M = 256   # row tile; keep n_pad/BLOCK_M >= 2 so both v7x TCs get work
    BLOCK_K = 512   # reduction (column) tile

    k_x, k_w, k_b = jax.random.split(key, 3)

    # Node features
    x = jax.random.normal(k_x, (N, D), dtype=jnp.float32)

    # Deterministic synthetic graph: ring edges (both directions) are 1-hop
    # (edge_attr = 1); 2-hop ring edges carry edge_attr = 2 (unused at t = 0).
    nodes = np.arange(N)
    src1 = np.concatenate([nodes, (nodes + 1) % N])
    dst1 = np.concatenate([(nodes + 1) % N, nodes])
    src2 = np.concatenate([nodes, (nodes + 2) % N])
    dst2 = np.concatenate([(nodes + 2) % N, nodes])
    edge_index = np.stack(
        [np.concatenate([src1, src2]), np.concatenate([dst1, dst2])], axis=0)
    edge_attr = np.concatenate([np.ones_like(src1), 2 * np.ones_like(src2)])

    # Parameters of W_kt['k=1, t=0'] (a GCNConv layer): weight (D, D), bias (1, D)
    w = jax.random.normal(k_w, (D, D), dtype=jnp.float32) * (1.0 / np.sqrt(D))
    b = jax.random.normal(k_b, (1, D), dtype=jnp.float32) * 0.01

    # alpha_t[0]: softmax over the single k=1 neighbourhood (* len == 1) -> 1.
    alpha = jnp.ones((1,), dtype=jnp.float32)

    dp = ((D + 127) // 128) * 128

    # Graph-static + parameter-static preprocessing done ONCE.
    adj_norm = build_normalized_adjacency(edge_index, edge_attr, k=1, num_nodes=N)
    adj_bf16, cols, cnt, n_blocks = prepare_graph(
        adj_norm, block_m=BLOCK_M, block_k=BLOCK_K)
    w_bf16, b_pad = prepare_params(w, b, dp=dp)

    out = drew_gnn_stage(x, adj_bf16, cols, cnt, w_bf16, b_pad, alpha,
                         block_m=BLOCK_M, block_k=BLOCK_K, n_blocks=n_blocks)
    jax.block_until_ready(out)

    # Pure-JAX f32 reference (kernel matmuls run in bf16 -> loose tolerance).
    adj_j = jnp.asarray(adj_norm)
    ref = x + jnp.maximum(alpha[0] * (adj_j @ (x @ w) + b), 0.0)
    assert out.shape == (N, D)
    assert jnp.allclose(out, ref, atol=5e-2, rtol=5e-2)

    print("KERNEL_OK")
</pallas_src>

<mosaic_0001>
module attributes {stable_mosaic.version = 11 : i64} {
  func.func @_fused_kernel(%arg0: i32, %arg1: i32, %arg2: memref<8xi32, #tpu.memory_space<smem>>, %arg3: memref<4xi32, #tpu.memory_space<smem>>, %arg4: memref<256x512xbf16, #tpu.memory_space<vmem>>, %arg5: memref<512x128xbf16, #tpu.memory_space<vmem>>, %arg6: memref<256x128xf32, #tpu.memory_space<vmem>>, %arg7: memref<128x128xbf16, #tpu.memory_space<vmem>>, %arg8: memref<1x128xf32, #tpu.memory_space<vmem>>, %arg9: memref<1xf32, #tpu.memory_space<smem>>, %arg10: memref<256x128xf32, #tpu.memory_space<vmem>>, %arg11: memref<256x128xf32, #tpu.memory_space<vmem>>) attributes {dimension_semantics = [#tpu.dimension_semantics<parallel>, #tpu.dimension_semantics<arbitrary>], iteration_bounds = array<i64: 4, 2>, scalar_prefetch = 2 : i64, scratch_operands = 1 : i64, tpu.core_type = #tpu.core_type<tc>, window_params = [{transform_indices = @transform_0, window_bounds = array<i64: 256, 512>}, {transform_indices = @transform_1, window_bounds = array<i64: 512, 128>}, {transform_indices = @transform_2, window_bounds = array<i64: 256, 128>}, {pipeline_mode = #tpu.pipeline_mode<synchronous>, transform_indices = @transform_3, window_bounds = array<i64: 128, 128>}, {pipeline_mode = #tpu.pipeline_mode<synchronous>, transform_indices = @transform_4, window_bounds = array<i64: 1, 128>}, {transform_indices = @transform_5, window_bounds = array<i64: 1>}, {transform_indices = @transform_6, window_bounds = array<i64: 256, 128>}]} {
    %c0_i32 = arith.constant 0 : i32
    %0 = arith.cmpi eq, %arg1, %c0_i32 : i32
    %1 = arith.extui %0 : i1 to i32
    %c0_i32_0 = arith.constant 0 : i32
    %2 = arith.cmpi ne, %1, %c0_i32_0 : i32
    scf.if %2 {
      %cst = arith.constant 0.000000e+00 : f32
      %11 = vector.broadcast %cst : f32 to vector<256x128xf32>
      %c0 = arith.constant 0 : index
      %c0_3 = arith.constant 0 : index
      %12 = vector.load %arg11[%c0, %c0_3] : memref<256x128xf32, #tpu.memory_space<vmem>>, vector<256x128xf32>
      tpu.vector_store %arg11[%c0, %c0_3], %11 {strides = array<i32>} : memref<256x128xf32, #tpu.memory_space<vmem>>, vector<256x128xf32>,
    } else {
    }
    %3 = arith.index_cast %arg0 : i32 to index
    %4 = memref.load %arg3[%3] : memref<4xi32, #tpu.memory_space<smem>>
    %5 = arith.cmpi slt, %arg1, %4 : i32
    %6 = arith.extui %5 : i1 to i32
    %c0_i32_1 = arith.constant 0 : i32
    %7 = arith.cmpi ne, %6, %c0_i32_1 : i32
    scf.if %7 {
      %c0 = arith.constant 0 : index
      %c0_3 = arith.constant 0 : index
      %11 = vector.load %arg11[%c0, %c0_3] : memref<256x128xf32, #tpu.memory_space<vmem>>, vector<256x128xf32>
      %c0_4 = arith.constant 0 : index
      %c0_5 = arith.constant 0 : index
      %12 = vector.load %arg4[%c0_4, %c0_5] : memref<256x512xbf16, #tpu.memory_space<vmem>>, vector<256x512xbf16>
      %c0_6 = arith.constant 0 : index
      %c0_7 = arith.constant 0 : index
      %13 = vector.load %arg5[%c0_6, %c0_7] : memref<512x128xbf16, #tpu.memory_space<vmem>>, vector<512x128xbf16>
      %cst = arith.constant dense<0.000000e+00> : vector<256x128xf32>
      %14 = tpu.matmul %12, %13, %cst {dimension_numbers = #tpu.dot_dimension_numbers<[1], [0], [0], [1], [0, 0, 1, 1], [], []>} : vector<256x512xbf16>, vector<512x128xbf16>, vector<256x128xf32> -> vector<256x128xf32>
      %15 = arith.addf %11, %14 : vector<256x128xf32>
      %c0_8 = arith.constant 0 : index
      %c0_9 = arith.constant 0 : index
      %16 = vector.load %arg11[%c0_8, %c0_9] : memref<256x128xf32, #tpu.memory_space<vmem>>, vector<256x128xf32>
      tpu.vector_store %arg11[%c0_8, %c0_9], %15 {strides = array<i32>} : memref<256x128xf32, #tpu.memory_space<vmem>>, vector<256x128xf32>,
    } else {
    }
    %c1_i32 = arith.constant 1 : i32
    %8 = arith.cmpi eq, %arg1, %c1_i32 : i32
    %9 = arith.extui %8 : i1 to i32
    %c0_i32_2 = arith.constant 0 : i32
    %10 = arith.cmpi ne, %9, %c0_i32_2 : i32
    scf.if %10 {
      %c0 = arith.constant 0 : index
      %c0_3 = arith.constant 0 : index
      %11 = vector.load %arg11[%c0, %c0_3] : memref<256x128xf32, #tpu.memory_space<vmem>>, vector<256x128xf32>
      %12 = arith.truncf %11 : vector<256x128xf32> to vector<256x128xbf16>
      %c0_4 = arith.constant 0 : index
      %c0_5 = arith.constant 0 : index
      %13 = vector.load %arg7[%c0_4, %c0_5] : memref<128x128xbf16, #tpu.memory_space<vmem>>, vector<128x128xbf16>
      %cst = arith.constant dense<0.000000e+00> : vector<256x128xf32>
      %14 = tpu.matmul %12, %13, %cst {dimension_numbers = #tpu.dot_dimension_numbers<[1], [0], [0], [1], [0, 0, 1, 1], [], []>} : vector<256x128xbf16>, vector<128x128xbf16>, vector<256x128xf32> -> vector<256x128xf32>
      %c0_6 = arith.constant 0 : index
      %c0_7 = arith.constant 0 : index
      %15 = vector.load %arg8[%c0_6, %c0_7] : memref<1x128xf32, #tpu.memory_space<vmem>>, vector<1x128xf32>
      %16 = vector.broadcast %15 : vector<1x128xf32> to vector<256x128xf32>
      %17 = arith.addf %14, %16 : vector<256x128xf32>
      %c0_8 = arith.constant 0 : index
      %c0_9 = arith.constant 0 : index
      %18 = vector.load %arg6[%c0_8, %c0_9] : memref<256x128xf32, #tpu.memory_space<vmem>>, vector<256x128xf32>
      %c0_10 = arith.constant 0 : index
      %19 = memref.load %arg9[%c0_10] : memref<1xf32, #tpu.memory_space<smem>>
      %20 = vector.broadcast %19 : f32 to vector<256x128xf32>
      %21 = arith.mulf %20, %17 : vector<256x128xf32>
      %cst_11 = arith.constant 0.000000e+00 : f32
      %22 = vector.broadcast %cst_11 : f32 to vector<256x128xf32>
      %23 = arith.maximumf %21, %22 : vector<256x128xf32>
      %24 = arith.addf %18, %23 : vector<256x128xf32>
      %c0_12 = arith.constant 0 : index
      %c0_13 = arith.constant 0 : index
      %25 = vector.load %arg10[%c0_12, %c0_13] : memref<256x128xf32, #tpu.memory_space<vmem>>, vector<256x128xf32>
      tpu.vector_store %arg10[%c0_12, %c0_13], %24 {strides = array<i32>} : memref<256x128xf32, #tpu.memory_space<vmem>>, vector<256x128xf32>,
    } else {
    }
    return
  }
  func.func @transform_0(%arg0: i32, %arg1: i32, %arg2: memref<8xi32, #tpu.memory_space<smem>>, %arg3: memref<4xi32, #tpu.memory_space<smem>>) -> (i32, i32) {
    %c2_i32 = arith.constant 2 : i32
    %0 = arith.muli %arg0, %c2_i32 : i32
    %1 = arith.addi %0, %arg1 : i32
    %2 = arith.index_cast %1 : i32 to index
    %3 = memref.load %arg2[%2] : memref<8xi32, #tpu.memory_space<smem>>
    %c0_i32 = arith.constant 0 : i32
    return %arg0, %3 : i32, i32
  }
  func.func @transform_1(%arg0: i32, %arg1: i32, %arg2: memref<8xi32, #tpu.memory_space<smem>>, %arg3: memref<4xi32, #tpu.memory_space<smem>>) -> (i32, i32) {
    %c2_i32 = arith.constant 2 : i32
    %0 = arith.muli %arg0, %c2_i32 : i32
    %1 = arith.addi %0, %arg1 : i32
    %2 = arith.index_cast %1 : i32 to index
    %3 = memref.load %arg2[%2] : memref<8xi32, #tpu.memory_space<smem>>
    %c0_i32 = arith.constant 0 : i32
    %c0_i32_0 = arith.constant 0 : i32
    return %3, %c0_i32 : i32, i32
  }
  func.func @transform_2(%arg0: i32, %arg1: i32, %arg2: memref<8xi32, #tpu.memory_space<smem>>, %arg3: memref<4xi32, #tpu.memory_space<smem>>) -> (i32, i32) {
    %c0_i32 = arith.constant 0 : i32
    %c0_i32_0 = arith.constant 0 : i32
    return %arg0, %c0_i32 : i32, i32
  }
  func.func @transform_3(%arg0: i32, %arg1: i32, %arg2: memref<8xi32, #tpu.memory_space<smem>>, %arg3: memref<4xi32, #tpu.memory_space<smem>>) -> (i32, i32) {
    %c0_i32 = arith.constant 0 : i32
    %c0_i32_0 = arith.constant 0 : i32
    %c0_i32_1 = arith.constant 0 : i32
    return %c0_i32, %c0_i32_0 : i32, i32
  }
  func.func @transform_4(%arg0: i32, %arg1: i32, %arg2: memref<8xi32, #tpu.memory_space<smem>>, %arg3: memref<4xi32, #tpu.memory_space<smem>>) -> (i32, i32) {
    %c0_i32 = arith.constant 0 : i32
    %c0_i32_0 = arith.constant 0 : i32
    %c0_i32_1 = arith.constant 0 : i32
    return %c0_i32, %c0_i32_0 : i32, i32
  }
  func.func @transform_5(%arg0: i32, %arg1: i32, %arg2: memref<8xi32, #tpu.memory_space<smem>>, %arg3: memref<4xi32, #tpu.memory_space<smem>>) -> i32 {
    %c0_i32 = arith.constant 0 : i32
    %c0_i32_0 = arith.constant 0 : i32
    return %c0_i32 : i32
  }
  func.func @transform_6(%arg0: i32, %arg1: i32, %arg2: memref<8xi32, #tpu.memory_space<smem>>, %arg3: memref<4xi32, #tpu.memory_space<smem>>) -> (i32, i32) {
    %c0_i32 = arith.constant 0 : i32
    %c0_i32_0 = arith.constant 0 : i32
    return %arg0, %c0_i32 : i32, i32
  }
}

</mosaic_0001>

<llo_original>
// kernel: drew_gnn_stage.1
$region0: #{drew_gnn_stage.1}
  #allocation0 [shape = 'u32[]', space=smem, size = 0x4, offset = 0x4, fixed_abs, tag = 'smem constant byte address 0x4 - core index']
  #allocation1 [shape = 'u32[72,128]{1,0:T(1,128)}', space=vmem, size = 0x9000, scoped, tag = 'internal scratch']
  #allocation2 [shape = 'f32[256,128]{1,0:T(8,128)}', space=vmem, size = 0x20000, scoped, tag = 'scratch operand']
  #allocation3 [shape = 's32[1]{0}', space=sflag, size = 0x4, scoped, tag = 'scoped memory for drew_gnn_stage.1']
  #allocation4 [shape = 'u8[512]{0}', space=smem, size = 0x200, scoped, tag = 'prefetched SMEM operand 0']
  #allocation5 [shape = 'u8[512]{0}', space=smem, size = 0x200, scoped, tag = 'prefetched SMEM operand 1']
  #allocation6 [shape = 'f32[1]{0:T(128)S(6)}', space=smem, size = 0x200, scoped, tag = 'scoped memory for drew_gnn_stage.1']
  %s0 = inlined_call_operand.vmem [shape: s32[8], index: 0, kind: input, shape index: {}]
  %s1 = inlined_call_operand.vmem [shape: s32[4], index: 1, kind: input, shape index: {}]
  %s2 = inlined_call_operand.vmem [shape: bf16[1024,1024], index: 2, kind: input, shape index: {}]
  %s3 = inlined_call_operand.vmem [shape: bf16[1024,128], index: 3, kind: input, shape index: {}]
  %s4 = inlined_call_operand.vmem [shape: f32[1024,128], index: 4, kind: input, shape index: {}]
  %s5 = inlined_call_operand.vmem [shape: bf16[128,128], index: 5, kind: input, shape index: {}]
  %s6 = inlined_call_operand.vmem [shape: f32[1,128], index: 6, kind: input, shape index: {}]
  %s7 = inlined_call_operand.<no memory space> [shape: f32[1], index: 7, kind: input, shape index: {}]
  %s8 = inlined_call_operand.vmem [shape: f32[1024,128], index: 8, kind: output, shape index: {}]
  %s9 = sld [smem:[#allocation0]]
  $region92: #{drew_gnn_stage.1} parent=0
    _
  %s11 = ssub.s32 1, %s9
  %s12 = scalar_select 0, %s11, %s9
  %s14 = sshll.u32 %s0, 4
  %s15 = int_to_ptr.vmem [resolvable:$true] %s14
  %17 = dma.vmem_to_smem %s15, 16, [#allocation4], [#allocation3]
  %s19 = sshll.u32 %s1, 4
  %s20 = int_to_ptr.vmem [resolvable:$true] %s19
  %22 = dma.vmem_to_smem %s20, 16, [#allocation5], [#allocation3]
  %23 = sst [smem:[#allocation6]] %s7
  %25 = dma.done [#allocation3], 32
  %26 = sfence
  $region1: #{drew_gnn_stage.1} parent=0
    #allocation7 [shape = 'u8[524288]{0}', space=vmem, size = 0x80000, scoped, tag = 'input window, operand 2']
    loop: start=0, step=1, limit=10
    $region2: #{drew_gnn_stage.1} parent=1 // loop_pre_header
      _
    $region3: #{drew_gnn_stage.1} parent=1 // loop_header
      %s28 = sphi 0, %s32
      %p29 = scmp.ge.s32.totalorder %s28, 10
      %s35 = sphi 0, %s47
      %s36 = sphi 0, %s43
      %s37 = sphi 0, %s35
      %s38 = sphi 0, %s36
      %s39 = sphi 0, %s37
      %s40 = sphi 0, %s38
      %s58 = sphi 0, %s60
      %s61 = sphi 0, %s58
      %s62 = sphi 0, %s61
      %s78 = sphi 0, %s62
      %s90 = sphi 0, %s92
      %s93 = sphi 0, %s90
      %s94 = sphi 0, %s93
      %s110 = sphi 0, %s94
      %s116 = sphi 0, %s118
      %s119 = sphi 0, %s116
      %s120 = sphi 0, %s119
      %s136 = sphi 0, %s120
      %s140 = sphi 0, %s140
      %s142 = sphi 0, %s140
      %s143 = sphi 0, %s142
      %s157 = sphi 0, %s143
      %s161 = sphi 0, %s161
      %s163 = sphi 0, %s161
      %s164 = sphi 0, %s163
      %s178 = sphi 0, %s164
      %s182 = sphi 0, %s182
      %s184 = sphi 0, %s182
      %s185 = sphi 0, %s184
      %s199 = sphi 0, %s185
      %s205 = sphi 0, %s207
      %s208 = sphi 0, %s205
      %s209 = sphi 0, %s208
      %s225 = sphi 0, %s209
    $region4: #{drew_gnn_stage.1} parent=1 // loop_header_branch
      %31 = sbr.rel (%p29) target = $region8
    $region5: #{drew_gnn_stage.1} parent=1 // loop_body
      %s33 = ssub.s32 %s28, 1
      %s34 = ssub.s32 %s28, 2
      %s41 = sadd.s32 1, %s36
      %p42 = scmp.ge.s32.totalorder %s41, 2
      %s43 = scalar_select %p42, 0, %s41
      %s44 = sadd.s32 1, %s35
      %s45 = scalar_select %p42, %s44, %s35
      %p46 = scmp.ge.s32.totalorder %s45, 4
      %s47 = scalar_select %p46, 0, %s45
      %s48 = smul.u32 %s35, 2
      %s49 = sadd.s32 %s48, %s36
      %s50 = sld [smem:[#allocation4 + %s49]]
      %s51 = smul.u32 %s47, 2
      %s52 = sadd.s32 %s51, %s43
      %s53 = sld [smem:[#allocation4 + %s52]]
      %s54 = ssub.s32 %s35, %s47
      %s55 = ssub.s32 %s50, %s53
      %s56 = sor.u32 %s54, %s55
      %p57 = scmp.eq.s32.totalorder %s56, 0
      %s59 = sadd.s32 %s58, 1
      %s60 = scalar_select %p57, %s58, %s59
      %p63 = pneg %p57
      %p64 = scmp.eq.s32.totalorder %s28, 7
      %p65 = por %p63, %p64
      %p66 = scmp.ne.s32.totalorder %s58, %s61
      %p67 = scmp.eq.s32.totalorder %s28, 0
      %p68 = por %p66, %p67
      %p69 = scmp.ne.s32.totalorder %s58, %s61
      %p70 = scmp.eq.s32.totalorder %s33, 7
      %p71 = por %p69, %p70
      %p72 = scmp.ne.s32.totalorder %s61, %s62
      %p73 = scmp.eq.s32.totalorder %s33, 0
      %p74 = por %p72, %p73
      %p75 = scmp.ne.s32.totalorder %s61, %s62
      %p76 = scmp.eq.s32.totalorder %s34, 7
      %p77 = por %p75, %p76
      %p79 = scmp.ne.s32.totalorder %s62, %s78
      %p80 = scmp.eq.s32.totalorder %s34, 0
      %p81 = por %p79, %p80
      %s82 = smul.u32 %s35, 2
      %s83 = sadd.s32 %s82, %s36
      %s84 = sld [smem:[#allocation4 + %s83]]
      %s85 = smul.u32 %s47, 2
      %s86 = sadd.s32 %s85, %s43
      %s87 = sld [smem:[#allocation4 + %s86]]
      %s88 = ssub.s32 %s84, %s87
      %p89 = scmp.eq.s32.totalorder %s88, 0
      %s91 = sadd.s32 %s90, 1
      %s92 = scalar_select %p89, %s90, %s91
      %p95 = pneg %p89
      %p96 = scmp.eq.s32.totalorder %s28, 7
      %p97 = por %p95, %p96
      %p98 = scmp.ne.s32.totalorder %s90, %s93
      %p99 = scmp.eq.s32.totalorder %s28, 0
      %p100 = por %p98, %p99
      %p101 = scmp.ne.s32.totalorder %s90, %s93
      %p102 = scmp.eq.s32.totalorder %s33, 7
      %p103 = por %p101, %p102
      %p104 = scmp.ne.s32.totalorder %s93, %s94
      %p105 = scmp.eq.s32.totalorder %s33, 0
      %p106 = por %p104, %p105
      %p107 = scmp.ne.s32.totalorder %s93, %s94
      %p108 = scmp.eq.s32.totalorder %s34, 7
      %p109 = por %p107, %p108
      %p111 = scmp.ne.s32.totalorder %s94, %s110
      %p112 = scmp.eq.s32.totalorder %s34, 0
      %p113 = por %p111, %p112
      %s114 = ssub.s32 %s35, %s47
      %p115 = scmp.eq.s32.totalorder %s114, 0
      %s117 = sadd.s32 %s116, 1
      %s118 = scalar_select %p115, %s116, %s117
      %p121 = pneg %p115
      %p122 = scmp.eq.s32.totalorder %s28, 7
      %p123 = por %p121, %p122
      %p124 = scmp.ne.s32.totalorder %s116, %s119
      %p125 = scmp.eq.s32.totalorder %s28, 0
      %p126 = por %p124, %p125
      %p127 = scmp.ne.s32.totalorder %s116, %s119
      %p128 = scmp.eq.s32.totalorder %s33, 7
      %p129 = por %p127, %p128
      %p130 = scmp.ne.s32.totalorder %s119, %s120
      %p131 = scmp.eq.s32.totalorder %s33, 0
      %p132 = por %p130, %p131
      %p133 = scmp.ne.s32.totalorder %s119, %s120
      %p134 = scmp.eq.s32.totalorder %s34, 7
      %p135 = por %p133, %p134
      %p137 = scmp.ne.s32.totalorder %s120, %s136
      %p138 = scmp.eq.s32.totalorder %s34, 0
      %p139 = por %p137, %p138
      %s141 = sadd.s32 %s140, 1
      %p144 = scmp.eq.s32.totalorder %s28, 7
      %p145 = scmp.ne.s32.totalorder %s140, %s142
      %p146 = scmp.eq.s32.totalorder %s28, 0
      %p147 = por %p145, %p146
      %p148 = scmp.ne.s32.totalorder %s140, %s142
      %p149 = scmp.eq.s32.totalorder %s33, 7
      %p150 = por %p148, %p149
      %p151 = scmp.ne.s32.totalorder %s142, %s143
      %p152 = scmp.eq.s32.totalorder %s33, 0
      %p153 = por %p151, %p152
      %p154 = scmp.ne.s32.totalorder %s142, %s143
      %p155 = scmp.eq.s32.totalorder %s34, 7
      %p156 = por %p154, %p155
      %p158 = scmp.ne.s32.totalorder %s143, %s157
      %p159 = scmp.eq.s32.totalorder %s34, 0
      %p160 = por %p158, %p159
      %s162 = sadd.s32 %s161, 1
      %p165 = scmp.eq.s32.totalorder %s28, 7
      %p166 = scmp.ne.s32.totalorder %s161, %s163
      %p167 = scmp.eq.s32.totalorder %s28, 0
      %p168 = por %p166, %p167
      %p169 = scmp.ne.s32.totalorder %s161, %s163
      %p170 = scmp.eq.s32.totalorder %s33, 7
      %p171 = por %p169, %p170
      %p172 = scmp.ne.s32.totalorder %s163, %s164
      %p173 = scmp.eq.s32.totalorder %s33, 0
      %p174 = por %p172, %p173
      %p175 = scmp.ne.s32.totalorder %s163, %s164
      %p176 = scmp.eq.s32.totalorder %s34, 7
      %p177 = por %p175, %p176
      %p179 = scmp.ne.s32.totalorder %s164, %s178
      %p180 = scmp.eq.s32.totalorder %s34, 0
      %p181 = por %p179, %p180
      %s183 = sadd.s32 %s182, 1
      %p186 = scmp.eq.s32.totalorder %s28, 7
      %p187 = scmp.ne.s32.totalorder %s182, %s184
      %p188 = scmp.eq.s32.totalorder %s28, 0
      %p189 = por %p187, %p188
      %p190 = scmp.ne.s32.totalorder %s182, %s184
      %p191 = scmp.eq.s32.totalorder %s33, 7
      %p192 = por %p190, %p191
      %p193 = scmp.ne.s32.totalorder %s184, %s185
      %p194 = scmp.eq.s32.totalorder %s33, 0
      %p195 = por %p193, %p194
      %p196 = scmp.ne.s32.totalorder %s184, %s185
      %p197 = scmp.eq.s32.totalorder %s34, 7
      %p198 = por %p196, %p197
      %p200 = scmp.ne.s32.totalorder %s185, %s199
      %p201 = scmp.eq.s32.totalorder %s34, 0
      %p202 = por %p200, %p201
      %s203 = ssub.s32 %s35, %s47
      %p204 = scmp.eq.s32.totalorder %s203, 0
      %s206 = sadd.s32 %s205, 1
      %s207 = scalar_select %p204, %s205, %s206
      %p210 = pneg %p204
      %p211 = scmp.eq.s32.totalorder %s28, 7
      %p212 = por %p210, %p211
      %p213 = scmp.ne.s32.totalorder %s205, %s208
      %p214 = scmp.eq.s32.totalorder %s28, 0
      %p215 = por %p213, %p214
      %p216 = scmp.ne.s32.totalorder %s205, %s208
      %p217 = scmp.eq.s32.totalorder %s33, 7
      %p218 = por %p216, %p217
      %p219 = scmp.ne.s32.totalorder %s208, %s209
      %p220 = scmp.eq.s32.totalorder %s33, 0
      %p221 = por %p219, %p220
      %p222 = scmp.ne.s32.totalorder %s208, %s209
      %p223 = scmp.eq.s32.totalorder %s34, 7
      %p224 = por %p222, %p223
      %p226 = scmp.ne.s32.totalorder %s209, %s225
      %p227 = scmp.eq.s32.totalorder %s34, 0
      %p228 = por %p226, %p227
      %p229 = scmp.le.s32.totalorder 1, %s28
      %p230 = scmp.lt.s32.totalorder %s28, 9
      %p231 = pnand %p229, %p230
      %p232 = pneg %p231
      // Predicated region
      $region9: #{drew_gnn_stage.1} parent=5 // pred_check
        _
      $region10: #{drew_gnn_stage.1} parent=5 // pred_check_branch
        %234 = sbr.rel (%p231) target = $region12
      $region11: #{drew_gnn_stage.1} parent=5 // pred_region
        %s235 = ssub.s32 %s28, 1
        // Predicated region
        $region13: #{drew_gnn_stage.1} parent=11 // pred_check
          %p236 = pneg %p153
        $region14: #{drew_gnn_stage.1} parent=11 // pred_check_branch
          %238 = sbr.rel (%p236) target = $region16
        $region15: #{drew_gnn_stage.1} parent=11 // pred_region
          _
        $region16: #{drew_gnn_stage.1} parent=11 // pred_fallthru
          _
        // Predicated region
        $region17: #{drew_gnn_stage.1} parent=11 // pred_check
          %p239 = pneg %p174
        $region18: #{drew_gnn_stage.1} parent=11 // pred_check_branch
          %241 = sbr.rel (%p239) target = $region20
        $region19: #{drew_gnn_stage.1} parent=11 // pred_region
          _
        $region20: #{drew_gnn_stage.1} parent=11 // pred_fallthru
          _
        // Predicated region
        $region21: #{drew_gnn_stage.1} parent=11 // pred_check
          %p242 = pneg %p195
        $region22: #{drew_gnn_stage.1} parent=11 // pred_check_branch
          %244 = sbr.rel (%p242) target = $region24
        $region23: #{drew_gnn_stage.1} parent=11 // pred_region
          _
        $region24: #{drew_gnn_stage.1} parent=11 // pred_fallthru
          _
      $region12: #{drew_gnn_stage.1} parent=5 // pred_fallthru
        _
      %p245 = scmp.lt.s32.totalorder %s28, 8
      // Predicated region
      $region25: #{drew_gnn_stage.1} parent=5 // pred_check
        %p246 = pneg %p245
      $region26: #{drew_gnn_stage.1} parent=5 // pred_check_branch
        %248 = sbr.rel (%p246) target = $region28
      $region27: #{drew_gnn_stage.1} parent=5 // pred_region
        // Predicated region
        $region29: #{drew_gnn_stage.1} parent=27 // pred_check
          %p249 = pneg %p68
        $region30: #{drew_gnn_stage.1} parent=27 // pred_check_branch
          %251 = sbr.rel (%p249) target = $region32
        $region31: #{drew_gnn_stage.1} parent=27 // pred_region
          %s252 = sand.u32 %s58, 1
          %s253 = sand.u32 %s58, 1
          %s254 = smul.addr %s253, 512
          %s255 = scalar_lea.vmem [#allocation7], %s254
          %s256 = smul.u32 %s35, 2
          %s257 = sadd.s32 %s256, %s36
          %s258 = sld [smem:[#allocation4 + %s257]]
          %s259 = smul.u32 32, %s35
          %s260 = smul.u32 4, %s258
          %s261 = smul.addr %s259, 8
          %s262 = sadd.s32 %s260, %s261
          %s263 = smul.addr %s262, 4
          %s264 = scalar_lea.vmem %s2, %s263
          // Predicated region
          $region33: #{drew_gnn_stage.1} parent=31 // pred_check
            _
          $region34: #{drew_gnn_stage.1} parent=31 // pred_check_branch
            %266 = sbr.rel (0) target = $region36
          $region35: #{drew_gnn_stage.1} parent=31 // pred_region
            // Predicated region
            $region37: #{drew_gnn_stage.1} parent=35 // pred_check
              _
            $region38: #{drew_gnn_stage.1} parent=35 // pred_check_branch
              %268 = sbr.rel (0) target = $region40
            $region39: #{drew_gnn_stage.1} parent=35 // pred_region
              loop: start=0, step=1, limit=1
              $region41: #{drew_gnn_stage.1} parent=39 // loop_pre_header
                _
              $region42: #{drew_gnn_stage.1} parent=39 // loop_header
                %s270 = sphi 0, %s274
                %p271 = scmp.ge.s32.totalorder %s270, 1
                %s275 = sphi %s264, %s264
                %s276 = sphi %s255, %s255
              $region43: #{drew_gnn_stage.1} parent=39 // loop_header_branch
                %273 = sbr.rel (%p271) target = $region47
              $region44: #{drew_gnn_stage.1} parent=39 // loop_body
                %v277 = vld [vmem:[%s275] sm:$0xff]
                %278 = vst [vmem:[%s276] sm:$0xff] %v277
                %v279 = vld [vmem:[%s275 + $0x8] sm:$0xff]
                %280 = vst [vmem:[%s276 + $0x8] sm:$0xff] %v279
                %v281 = vld [vmem:[%s275 + $0x20] sm:$0xff]
                %282 = vst [vmem:[%s276 + $0x10] sm:$0xff] %v281
                %v283 = vld [vmem:[%s275 + $0x28] sm:$0xff]
                %284 = vst [vmem:[%s276 + $0x18] sm:$0xff] %v283
                %v285 = vld [vmem:[%s275 + $0x40] sm:$0xff]
                %286 = vst [vmem:[%s276 + $0x20] sm:$0xff] %v285
                %v287 = vld [vmem:[%s275 + $0x48] sm:$0xff]
                %288 = vst [vmem:[%s276 + $0x28] sm:$0xff] %v287
                %v289 = vld [vmem:[%s275 + $0x60] sm:$0xff]
                %290 = vst [vmem:[%s276 + $0x30] sm:$0xff] %v289
                %v291 = vld [vmem:[%s275 + $0x68] sm:$0xff]
                %292 = vst [vmem:[%s276 + $0x38] sm:$0xff] %v291
                %v293 = vld [vmem:[%s275 + $0x80] sm:$0xff]
                %294 = vst [vmem:[%s276 + $0x40] sm:$0xff] %v293
                %v295 = vld [vmem:[%s275 + $0x88] sm:$0xff]
                %296 = vst [vmem:[%s276 + $0x48] sm:$0xff] %v295
                %v297 = vld [vmem:[%s275 + $0xa0] sm:$0xff]
                %298 = vst [vmem:[%s276 + $0x50] sm:$0xff] %v297
                %v299 = vld [vmem:[%s275 + $0xa8] sm:$0xff]
                %300 = vst [vmem:[%s276 + $0x58] sm:$0xff] %v299
                %v301 = vld [vmem:[%s275 + $0xc0] sm:$0xff]
                %302 = vst [vmem:[%s276 + $0x60] sm:$0xff] %v301
                %v303 = vld [vmem:[%s275 + $0xc8] sm:$0xff]
                %304 = vst [vmem:[%s276 + $0x68] sm:$0xff] %v303
                %v305 = vld [vmem:[%s275 + $0xe0] sm:$0xff]
                %306 = vst [vmem:[%s276 + $0x70] sm:$0xff] %v305
                %v307 = vld [vmem:[%s275 + $0xe8] sm:$0xff]
                %308 = vst [vmem:[%s276 + $0x78] sm:$0xff] %v307
                %v309 = vld [vmem:[%s275 + $0x100] sm:$0xff]
                %310 = vst [vmem:[%s276 + $0x80] sm:$0xff] %v309
                %v311 = vld [vmem:[%s275 + $0x108] sm:$0xff]
                %312 = vst [vmem:[%s276 + $0x88] sm:$0xff] %v311
                %v313 = vld [vmem:[%s275 + $0x120] sm:$0xff]
                %314 = vst [vmem:[%s276 + $0x90] sm:$0xff] %v313
                %v315 = vld [vmem:[%s275 + $0x128] sm:$0xff]
                %316 = vst [vmem:[%s276 + $0x98] sm:$0xff] %v315
                %v317 = vld [vmem:[%s275 + $0x140] sm:$0xff]
                %318 = vst [vmem:[%s276 + $0xa0] sm:$0xff] %v317
                %v319 = vld [vmem:[%s275 + $0x148] sm:$0xff]
                %320 = vst [vmem:[%s276 + $0xa8] sm:$0xff] %v319
                %v321 = vld [vmem:[%s275 + $0x160] sm:$0xff]
                %322 = vst [vmem:[%s276 + $0xb0] sm:$0xff] %v321
                %v323 = vld [vmem:[%s275 + $0x168] sm:$0xff]
                %324 = vst [vmem:[%s276 + $0xb8] sm:$0xff] %v323
                %v325 = vld [vmem:[%s275 + $0x180] sm:$0xff]
                %326 = vst [vmem:[%s276 + $0xc0] sm:$0xff] %v325
                %v327 = vld [vmem:[%s275 + $0x188] sm:$0xff]
                %328 = vst [vmem:[%s276 + $0xc8] sm:$0xff] %v327
                %v329 = vld [vmem:[%s275 + $0x1a0] sm:$0xff]
                %330 = vst [vmem:[%s276 + $0xd0] sm:$0xff] %v329
                %v331 = vld [vmem:[%s275 + $0x1a8] sm:$0xff]
                %332 = vst [vmem:[%s276 + $0xd8] sm:$0xff] %v331
                %v333 = vld [vmem:[%s275 + $0x1c0] sm:$0xff]
                %334 = vst [vmem:[%s276 + $0xe0] sm:$0xff] %v333
                %v335 = vld [vmem:[%s275 + $0x1c8] sm:$0xff]
                %336 = vst [vmem:[%s276 + $0xe8] sm:$0xff] %v335
                %v337 = vld [vmem:[%s275 + $0x1e0] sm:$0xff]
                %338 = vst [vmem:[%s276 + $0xf0] sm:$0xff] %v337
                %v339 = vld [vmem:[%s275 + $0x1e8] sm:$0xff]
                %340 = vst [vmem:[%s276 + $0xf8] sm:$0xff] %v339
                %v341 = vld [vmem:[%s275 + $0x200] sm:$0xff]
                %342 = vst [vmem:[%s276 + $0x100] sm:$0xff] %v341
                %v343 = vld [vmem:[%s275 + $0x208] sm:$0xff]
                %344 = vst [vmem:[%s276 + $0x108] sm:$0xff] %v343
                %v345 = vld [vmem:[%s275 + $0x220] sm:$0xff]
                %346 = vst [vmem:[%s276 + $0x110] sm:$0xff] %v345
                %v347 = vld [vmem:[%s275 + $0x228] sm:$0xff]
                %348 = vst [vmem:[%s276 + $0x118] sm:$0xff] %v347
                %v349 = vld [vmem:[%s275 + $0x240] sm:$0xff]
                %350 = vst [vmem:[%s276 + $0x120] sm:$0xff] %v349
                %v351 = vld [vmem:[%s275 + $0x248] sm:$0xff]
                %352 = vst [vmem:[%s276 + $0x128] sm:$0xff] %v351
                %v353 = vld [vmem:[%s275 + $0x260] sm:$0xff]
                %354 = vst [vmem:[%s276 + $0x130] sm:$0xff] %v353
                %v355 = vld [vmem:[%s275 + $0x268] sm:$0xff]
                %356 = vst [vmem:[%s276 + $0x138] sm:$0xff] %v355
                %v357 = vld [vmem:[%s275 + $0x280] sm:$0xff]
                %358 = vst [vmem:[%s276 + $0x140] sm:$0xff] %v357
                %v359 = vld [vmem:[%s275 + $0x288] sm:$0xff]
                %360 = vst [vmem:[%s276 + $0x148] sm:$0xff] %v359
                %v361 = vld [vmem:[%s275 + $0x2a0] sm:$0xff]
                %362 = vst [vmem:[%s276 + $0x150] sm:$0xff] %v361
                %v363 = vld [vmem:[%s275 + $0x2a8] sm:$0xff]
                %364 = vst [vmem:[%s276 + $0x158] sm:$0xff] %v363
                %v365 = vld [vmem:[%s275 + $0x2c0] sm:$0xff]
                %366 = vst [vmem:[%s276 + $0x160] sm:$0xff] %v365
                %v367 = vld [vmem:[%s275 + $0x2c8] sm:$0xff]
                %368 = vst [vmem:[%s276 + $0x168] sm:$0xff] %v367
                %v369 = vld [vmem:[%s275 + $0x2e0] sm:$0xff]
                %370 = vst [vmem:[%s276 + $0x170] sm:$0xff] %v369
                %v371 = vld [vmem:[%s275 + $0x2e8] sm:$0xff]
                %372 = vst [vmem:[%s276 + $0x178] sm:$0xff] %v371
                %v373 = vld [vmem:[%s275 + $0x300] sm:$0xff]
                %374 = vst [vmem:[%s276 + $0x180] sm:$0xff] %v373
                %v375 = vld [vmem:[%s275 + $0x308] sm:$0xff]
                %376 = vst [vmem:[%s276 + $0x188] sm:$0xff] %v375
                %v377 = vld [vmem:[%s275 + $0x320] sm:$0xff]
                %378 = vst [vmem:[%s276 + $0x190] sm:$0xff] %v377
                %v379 = vld [vmem:[%s275 + $0x328] sm:$0xff]
                %380 = vst [vmem:[%s276 + $0x198] sm:$0xff] %v379
                %v381 = vld [vmem:[%s275 + $0x340] sm:$0xff]
                %382 = vst [vmem:[%s276 + $0x1a0] sm:$0xff] %v381
                %v383 = vld [vmem:[%s275 + $0x348] sm:$0xff]
                %384 = vst [vmem:[%s276 + $0x1a8] sm:$0xff] %v383
                %v385 = vld [vmem:[%s275 + $0x360] sm:$0xff]
                %386 = vst [vmem:[%s276 + $0x1b0] sm:$0xff] %v385
                %v387 = vld [vmem:[%s275 + $0x368] sm:$0xff]
                %388 = vst [vmem:[%s276 + $0x1b8] sm:$0xff] %v387
                %v389 = vld [vmem:[%s275 + $0x380] sm:$0xff]
                %390 = vst [vmem:[%s276 + $0x1c0] sm:$0xff] %v389
                %v391 = vld [vmem:[%s275 + $0x388] sm:$0xff]
                %392 = vst [vmem:[%s276 + $0x1c8] sm:$0xff] %v391
                %v393 = vld [vmem:[%s275 + $0x3a0] sm:$0xff]
                %394 = vst [vmem:[%s276 + $0x1d0] sm:$0xff] %v393
                %v395 = vld [vmem:[%s275 + $0x3a8] sm:$0xff]
                %396 = vst [vmem:[%s276 + $0x1d8] sm:$0xff] %v395
                %v397 = vld [vmem:[%s275 + $0x3c0] sm:$0xff]
                %398 = vst [vmem:[%s276 + $0x1e0] sm:$0xff] %v397
                %v399 = vld [vmem:[%s275 + $0x3c8] sm:$0xff]
                %400 = vst [vmem:[%s276 + $0x1e8] sm:$0xff] %v399
                %v401 = vld [vmem:[%s275 + $0x3e0] sm:$0xff]
                %402 = vst [vmem:[%s276 + $0x1f0] sm:$0xff] %v401
                %v403 = vld [vmem:[%s275 + $0x3e8] sm:$0xff]
                %404 = vst [vmem:[%s276 + $0x1f8] sm:$0xff] %v403
              $region45: #{drew_gnn_stage.1} parent=39 // loop_footer
                %s274 = sadd.s32 1, %s270
              $region46: #{drew_gnn_stage.1} parent=39 // loop_footer_branch
                %269 = sbr.rel target = $region42
              $region47: #{drew_gnn_stage.1} parent=39 // loop_exit
                _
            $region40: #{drew_gnn_stage.1} parent=35 // pred_fallthru
              _
            // Predicated region
            $region48: #{drew_gnn_stage.1} parent=35 // pred_check
              _
            $region49: #{drew_gnn_stage.1} parent=35 // pred_check_branch
              %406 = sbr.rel target = $region51
            $region50: #{drew_gnn_stage.1} parent=35 // pred_region
              _
            $region51: #{drew_gnn_stage.1} parent=35 // pred_fallthru
              _
          $region36: #{drew_gnn_stage.1} parent=31 // pred_fallthru
            _
          %407 = vnop
        $region32: #{drew_gnn_stage.1} parent=27 // pred_fallthru
          _
        // Predicated region
        $region52: #{drew_gnn_stage.1} parent=27 // pred_check
          %p408 = pneg %p100
        $region53: #{drew_gnn_stage.1} parent=27 // pred_check_branch
          %410 = sbr.rel (%p408) target = $region55
        $region54: #{drew_gnn_stage.1} parent=27 // pred_region
          %s411 = smul.u32 %s35, 2
          %s412 = sadd.s32 %s411, %s36
          %s413 = sld [smem:[#allocation4 + %s412]]
          %s414 = smul.u32 64, %s413
          %p415 = scmp.lt.s32.totalorder %s414, 127
          %s416 = scalar_select %p415, %s414, 127
          %s417 = smul.addr %s416, 4
          %s418 = scalar_lea.vmem %s3, %s417
          %s419 = smul.u32 %s35, 2
          %s420 = sadd.s32 %s419, %s36
          %s421 = sld [smem:[#allocation4 + %s420]]
          %s422 = smul.u32 64, %s421
        $region55: #{drew_gnn_stage.1} parent=27 // pred_fallthru
          _
        // Predicated region
        $region56: #{drew_gnn_stage.1} parent=27 // pred_check
          %p423 = pneg %p126
        $region57: #{drew_gnn_stage.1} parent=27 // pred_check_branch
          %425 = sbr.rel (%p423) target = $region59
        $region58: #{drew_gnn_stage.1} parent=27 // pred_region
          %s426 = smul.u32 32, %s35
          %p427 = scmp.lt.s32.totalorder %s426, 127
          %s428 = scalar_select %p427, %s426, 127
          %s429 = smul.addr %s428, 8
          %s430 = scalar_lea.vmem %s4, %s429
          %s431 = smul.u32 32, %s35
        $region59: #{drew_gnn_stage.1} parent=27 // pred_fallthru
          _
      $region28: #{drew_gnn_stage.1} parent=5 // pred_fallthru
        _
      %p432 = scmp.le.s32.totalorder 1, %s28
      %p433 = scmp.lt.s32.totalorder %s28, 9
      %p434 = pnand %p432, %p433
      %p435 = pneg %p434
      // Predicated region
      $region60: #{drew_gnn_stage.1} parent=5 // pred_check
        _
      $region61: #{drew_gnn_stage.1} parent=5 // pred_check_branch
        %437 = sbr.rel (%p434) target = $region63
      $region62: #{drew_gnn_stage.1} parent=5 // pred_region
        %s438 = ssub.s32 %s28, 1
        %s439 = sand.u32 %s61, 1
        %s440 = sand.u32 %s61, 1
        %s441 = smul.addr %s440, 512
        %s442 = scalar_lea.vmem [#allocation7], %s441
        // Predicated region
        $region64: #{drew_gnn_stage.1} parent=62 // pred_check
          %p443 = pneg %p74
        $region65: #{drew_gnn_stage.1} parent=62 // pred_check_branch
          %445 = sbr.rel (%p443) target = $region67
        $region66: #{drew_gnn_stage.1} parent=62 // pred_region
          _
        $region67: #{drew_gnn_stage.1} parent=62 // pred_fallthru
          _
        %s446 = sand.u32 %s61, 1
        %s447 = sand.u32 %s61, 1
        %s448 = smul.addr %s447, 512
        %s449 = scalar_lea.vmem [#allocation7], %s448
        %p450 = pneg %p74
        %p451 = pneg %p71
        %s452 = smul.u32 %s37, 2
        %s453 = sadd.s32 %s452, %s38
        %s454 = sld [smem:[#allocation4 + %s453]]
        %s455 = smul.u32 64, %s454
        %p456 = scmp.lt.s32.totalorder %s455, 127
        %s457 = scalar_select %p456, %s455, 127
        %s458 = smul.addr %s457, 4
        %s459 = scalar_lea.vmem %s3, %s458
        %p460 = pneg %p106
        %p461 = pneg %p103
        %s462 = smul.u32 32, %s37
        %p463 = scmp.lt.s32.totalorder %s462, 127
        %s464 = scalar_select %p463, %s462, 127
        %s465 = smul.addr %s464, 8
        %s466 = scalar_lea.vmem %s4, %s465
        %p467 = pneg %p132
        %p468 = pneg %p129
        %p469 = pneg %p153
        %p470 = pneg %p150
        %p471 = pneg %p174
        %p472 = pneg %p171
        %p473 = pneg %p195
        %p474 = pneg %p192
        %p475 = pneg %p221
        %p476 = pneg %p218
        %s477 = smul.u32 32, %s37
        %p478 = scmp.lt.s32.totalorder %s477, 127
        %s479 = scalar_select %p478, %s477, 127
        %s480 = smul.addr %s479, 8
        %s481 = scalar_lea.vmem %s8, %s480
        %s482 = smul.u32 %s37, 2
        %s483 = sadd.s32 %s482, %s38
        %s484 = sld [smem:[#allocation4 + %s483]]
        %s485 = smul.u32 32, %s37
        %s486 = smul.u32 4, %s484
        %s487 = smul.u32 %s37, 2
        %s488 = sadd.s32 %s487, %s38
        %s489 = sld [smem:[#allocation4 + %s488]]
        %s490 = smul.u32 64, %s489
        %p491 = scmp.lt.s32.totalorder %s490, 127
        %s492 = scalar_select %p491, %s490, 127
        %s493 = smul.addr %s492, 4
        %s494 = scalar_lea.vmem %s3, %s493
        %s495 = smul.u32 %s37, 2
        %s496 = sadd.s32 %s495, %s38
        %s497 = sld [smem:[#allocation4 + %s496]]
        %s498 = smul.u32 64, %s497
        %s499 = smul.u32 32, %s37
        %p500 = scmp.lt.s32.totalorder %s499, 127
        %s501 = scalar_select %p500, %s499, 127
        %s502 = smul.addr %s501, 8
        %s503 = scalar_lea.vmem %s4, %s502
        %s504 = smul.u32 32, %s37
        %s505 = smul.u32 32, %s37
        %p506 = scmp.lt.s32.totalorder %s505, 127
        %s507 = scalar_select %p506, %s505, 127
        %s508 = smul.addr %s507, 8
        %s509 = scalar_lea.vmem %s8, %s508
        %s510 = smul.u32 32, %s37
        %p511 = scmp.eq.s32.totalorder %s38, 0
        // Predicated region
        $region68: #{drew_gnn_stage.1} parent=62 // pred_check
          %p512 = pneg %p511
        $region69: #{drew_gnn_stage.1} parent=62 // pred_check_branch
          %514 = sbr.rel (%p512) target = $region71
        $region70: #{drew_gnn_stage.1} parent=62 // pred_region
          %515 = vst [vmem:[#allocation2] sm:$0xff] 0.0
          %516 = vst [vmem:[#allocation2 + $0x8] sm:$0xff] 0.0
          %517 = vst [vmem:[#allocation2 + $0x10] sm:$0xff] 0.0
          %518 = vst [vmem:[#allocation2 + $0x18] sm:$0xff] 0.0
          %519 = vst [vmem:[#allocation2 + $0x20] sm:$0xff] 0.0
          %520 = vst [vmem:[#allocation2 + $0x28] sm:$0xff] 0.0
          %521 = vst [vmem:[#allocation2 + $0x30] sm:$0xff] 0.0
          %522 = vst [vmem:[#allocation2 + $0x38] sm:$0xff] 0.0
          %523 = vst [vmem:[#allocation2 + $0x40] sm:$0xff] 0.0
          %524 = vst [vmem:[#allocation2 + $0x48] sm:$0xff] 0.0
          %525 = vst [vmem:[#allocation2 + $0x50] sm:$0xff] 0.0
          %526 = vst [vmem:[#allocation2 + $0x58] sm:$0xff] 0.0
          %527 = vst [vmem:[#allocation2 + $0x60] sm:$0xff] 0.0
          %528 = vst [vmem:[#allocation2 + $0x68] sm:$0xff] 0.0
          %529 = vst [vmem:[#allocation2 + $0x70] sm:$0xff] 0.0
          %530 = vst [vmem:[#allocation2 + $0x78] sm:$0xff] 0.0
          %531 = vst [vmem:[#allocation2 + $0x80] sm:$0xff] 0.0
          %532 = vst [vmem:[#allocation2 + $0x88] sm:$0xff] 0.0
          %533 = vst [vmem:[#allocation2 + $0x90] sm:$0xff] 0.0
          %534 = vst [vmem:[#allocation2 + $0x98] sm:$0xff] 0.0
          %535 = vst [vmem:[#allocation2 + $0xa0] sm:$0xff] 0.0
          %536 = vst [vmem:[#allocation2 + $0xa8] sm:$0xff] 0.0
          %537 = vst [vmem:[#allocation2 + $0xb0] sm:$0xff] 0.0
          %538 = vst [vmem:[#allocation2 + $0xb8] sm:$0xff] 0.0
          %539 = vst [vmem:[#allocation2 + $0xc0] sm:$0xff] 0.0
          %540 = vst [vmem:[#allocation2 + $0xc8] sm:$0xff] 0.0
          %541 = vst [vmem:[#allocation2 + $0xd0] sm:$0xff] 0.0
          %542 = vst [vmem:[#allocation2 + $0xd8] sm:$0xff] 0.0
          %543 = vst [vmem:[#allocation2 + $0xe0] sm:$0xff] 0.0
          %544 = vst [vmem:[#allocation2 + $0xe8] sm:$0xff] 0.0
          %545 = vst [vmem:[#allocation2 + $0xf0] sm:$0xff] 0.0
          %546 = vst [vmem:[#allocation2 + $0xf8] sm:$0xff] 0.0
        $region71: #{drew_gnn_stage.1} parent=62 // pred_fallthru
          _
        %s547 = sld [smem:[#allocation5 + %s37]]
        %p548 = scmp.lt.s32.totalorder %s38, %s547
        // Predicated region
        $region72: #{drew_gnn_stage.1} parent=62 // pred_check
          %p549 = pneg %p548
        $region73: #{drew_gnn_stage.1} parent=62 // pred_check_branch
          %551 = sbr.rel (%p549) target = $region75
        $region74: #{drew_gnn_stage.1} parent=62 // pred_region
          %v552 = vld [vmem:[#allocation2] sm:$0xff]
          %v553 = vld [vmem:[#allocation2 + $0x8] sm:$0xff]
          %v554 = vld [vmem:[#allocation2 + $0x10] sm:$0xff]
          %v555 = vld [vmem:[#allocation2 + $0x18] sm:$0xff]
          %v556 = vld [vmem:[#allocation2 + $0x20] sm:$0xff]
          %v557 = vld [vmem:[#allocation2 + $0x28] sm:$0xff]
          %v558 = vld [vmem:[#allocation2 + $0x30] sm:$0xff]
          %v559 = vld [vmem:[#allocation2 + $0x38] sm:$0xff]
          %v560 = vld [vmem:[#allocation2 + $0x40] sm:$0xff]
          %v561 = vld [vmem:[#allocation2 + $0x48] sm:$0xff]
          %v562 = vld [vmem:[#allocation2 + $0x50] sm:$0xff]
          %v563 = vld [vmem:[#allocation2 + $0x58] sm:$0xff]
          %v564 = vld [vmem:[#allocation2 + $0x60] sm:$0xff]
          %v565 = vld [vmem:[#allocation2 + $0x68] sm:$0xff]
          %v566 = vld [vmem:[#allocation2 + $0x70] sm:$0xff]
          %v567 = vld [vmem:[#allocation2 + $0x78] sm:$0xff]
          %v568 = vld [vmem:[#allocation2 + $0x80] sm:$0xff]
          %v569 = vld [vmem:[#allocation2 + $0x88] sm:$0xff]
          %v570 = vld [vmem:[#allocation2 + $0x90] sm:$0xff]
          %v571 = vld [vmem:[#allocation2 + $0x98] sm:$0xff]
          %v572 = vld [vmem:[#allocation2 + $0xa0] sm:$0xff]
          %v573 = vld [vmem:[#allocation2 + $0xa8] sm:$0xff]
          %v574 = vld [vmem:[#allocation2 + $0xb0] sm:$0xff]
          %v575 = vld [vmem:[#allocation2 + $0xb8] sm:$0xff]
          %v576 = vld [vmem:[#allocation2 + $0xc0] sm:$0xff]
          %v577 = vld [vmem:[#allocation2 + $0xc8] sm:$0xff]
          %v578 = vld [vmem:[#allocation2 + $0xd0] sm:$0xff]
          %v579 = vld [vmem:[#allocation2 + $0xd8] sm:$0xff]
          %v580 = vld [vmem:[#allocation2 + $0xe0] sm:$0xff]
          %v581 = vld [vmem:[#allocation2 + $0xe8] sm:$0xff]
          %v582 = vld [vmem:[#allocation2 + $0xf0] sm:$0xff]
          %v583 = vld [vmem:[#allocation2 + $0xf8] sm:$0xff]
          %v584 = vld [vmem:[%s442] sm:$0xff]
          %v585 = vld [vmem:[%s442 + $0x8] sm:$0xff]
          %v586 = vld [vmem:[%s442 + $0x10] sm:$0xff]
          %v587 = vld [vmem:[%s442 + $0x18] sm:$0xff]
          %v588 = vld [vmem:[%s442 + $0x20] sm:$0xff]
          %v589 = vld [vmem:[%s442 + $0x28] sm:$0xff]
          %v590 = vld [vmem:[%s442 + $0x30] sm:$0xff]
          %v591 = vld [vmem:[%s442 + $0x38] sm:$0xff]
          %v592 = vld [vmem:[%s442 + $0x40] sm:$0xff]
          %v593 = vld [vmem:[%s442 + $0x48] sm:$0xff]
          %v594 = vld [vmem:[%s442 + $0x50] sm:$0xff]
          %v595 = vld [vmem:[%s442 + $0x58] sm:$0xff]
          %v596 = vld [vmem:[%s442 + $0x60] sm:$0xff]
          %v597 = vld [vmem:[%s442 + $0x68] sm:$0xff]
          %v598 = vld [vmem:[%s442 + $0x70] sm:$0xff]
          %v599 = vld [vmem:[%s442 + $0x78] sm:$0xff]
          %v600 = vld [vmem:[%s442 + $0x80] sm:$0xff]
          %v601 = vld [vmem:[%s442 + $0x88] sm:$0xff]
          %v602 = vld [vmem:[%s442 + $0x90] sm:$0xff]
          %v603 = vld [vmem:[%s442 + $0x98] sm:$0xff]
          %v604 = vld [vmem:[%s442 + $0xa0] sm:$0xff]
          %v605 = vld [vmem:[%s442 + $0xa8] sm:$0xff]
          %v606 = vld [vmem:[%s442 + $0xb0] sm:$0xff]
          %v607 = vld [vmem:[%s442 + $0xb8] sm:$0xff]
          %v608 = vld [vmem:[%s442 + $0xc0] sm:$0xff]
          %v609 = vld [vmem:[%s442 + $0xc8] sm:$0xff]
          %v610 = vld [vmem:[%s442 + $0xd0] sm:$0xff]
          %v611 = vld [vmem:[%s442 + $0xd8] sm:$0xff]
          %v612 = vld [vmem:[%s442 + $0xe0] sm:$0xff]
          %v613 = vld [vmem:[%s442 + $0xe8] sm:$0xff]
          %v614 = vld [vmem:[%s442 + $0xf0] sm:$0xff]
          %v615 = vld [vmem:[%s442 + $0xf8] sm:$0xff]
          %v616 = vld [vmem:[%s442 + $0x100] sm:$0xff]
          %v617 = vld [vmem:[%s442 + $0x108] sm:$0xff]
          %v618 = vld [vmem:[%s442 + $0x110] sm:$0xff]
          %v619 = vld [vmem:[%s442 + $0x118] sm:$0xff]
          %v620 = vld [vmem:[%s442 + $0x120] sm:$0xff]
          %v621 = vld [vmem:[%s442 + $0x128] sm:$0xff]
          %v622 = vld [vmem:[%s442 + $0x130] sm:$0xff]
          %v623 = vld [vmem:[%s442 + $0x138] sm:$0xff]
          %v624 = vld [vmem:[%s442 + $0x140] sm:$0xff]
          %v625 = vld [vmem:[%s442 + $0x148] sm:$0xff]
          %v626 = vld [vmem:[%s442 + $0x150] sm:$0xff]
          %v627 = vld [vmem:[%s442 + $0x158] sm:$0xff]
          %v628 = vld [vmem:[%s442 + $0x160] sm:$0xff]
          %v629 = vld [vmem:[%s442 + $0x168] sm:$0xff]
          %v630 = vld [vmem:[%s442 + $0x170] sm:$0xff]
          %v631 = vld [vmem:[%s442 + $0x178] sm:$0xff]
          %v632 = vld [vmem:[%s442 + $0x180] sm:$0xff]
          %v633 = vld [vmem:[%s442 + $0x188] sm:$0xff]
          %v634 = vld [vmem:[%s442 + $0x190] sm:$0xff]
          %v635 = vld [vmem:[%s442 + $0x198] sm:$0xff]
          %v636 = vld [vmem:[%s442 + $0x1a0] sm:$0xff]
          %v637 = vld [vmem:[%s442 + $0x1a8] sm:$0xff]
          %v638 = vld [vmem:[%s442 + $0x1b0] sm:$0xff]
          %v639 = vld [vmem:[%s442 + $0x1b8] sm:$0xff]
          %v640 = vld [vmem:[%s442 + $0x1c0] sm:$0xff]
          %v641 = vld [vmem:[%s442 + $0x1c8] sm:$0xff]
          %v642 = vld [vmem:[%s442 + $0x1d0] sm:$0xff]
          %v643 = vld [vmem:[%s442 + $0x1d8] sm:$0xff]
          %v644 = vld [vmem:[%s442 + $0x1e0] sm:$0xff]
          %v645 = vld [vmem:[%s442 + $0x1e8] sm:$0xff]
          %v646 = vld [vmem:[%s442 + $0x1f0] sm:$0xff]
          %v647 = vld [vmem:[%s442 + $0x1f8] sm:$0xff]
          %v648 = vld [vmem:[%s494] sm:$0xf]
          %v649 = vld [vmem:[%s494 + $0x4] sm:$0xf]
          %v650 = vld [vmem:[%s494 + $0x8] sm:$0xf]
          %v651 = vld [vmem:[%s494 + $0xc] sm:$0xf]
          %v652 = vld [vmem:[%s494 + $0x10] sm:$0xf]
          %v653 = vld [vmem:[%s494 + $0x14] sm:$0xf]
          %v654 = vld [vmem:[%s494 + $0x18] sm:$0xf]
          %v655 = vld [vmem:[%s494 + $0x1c] sm:$0xf]
          %v656 = vld [vmem:[%s494 + $0x20] sm:$0xf]
          %v657 = vld [vmem:[%s494 + $0x24] sm:$0xf]
          %v658 = vld [vmem:[%s494 + $0x28] sm:$0xf]
          %v659 = vld [vmem:[%s494 + $0x2c] sm:$0xf]
          %v660 = vld [vmem:[%s494 + $0x30] sm:$0xf]
          %v661 = vld [vmem:[%s494 + $0x34] sm:$0xf]
          %v662 = vld [vmem:[%s494 + $0x38] sm:$0xf]
          %v663 = vld [vmem:[%s494 + $0x3c] sm:$0xf]
          %v664 = vld [vmem:[%s494 + $0x40] sm:$0xf]
          %v665 = vld [vmem:[%s494 + $0x44] sm:$0xf]
          %v666 = vld [vmem:[%s494 + $0x48] sm:$0xf]
          %v667 = vld [vmem:[%s494 + $0x4c] sm:$0xf]
          %v668 = vld [vmem:[%s494 + $0x50] sm:$0xf]
          %v669 = vld [vmem:[%s494 + $0x54] sm:$0xf]
          %v670 = vld [vmem:[%s494 + $0x58] sm:$0xf]
          %v671 = vld [vmem:[%s494 + $0x5c] sm:$0xf]
          %v672 = vld [vmem:[%s494 + $0x60] sm:$0xf]
          %v673 = vld [vmem:[%s494 + $0x64] sm:$0xf]
          %v674 = vld [vmem:[%s494 + $0x68] sm:$0xf]
          %v675 = vld [vmem:[%s494 + $0x6c] sm:$0xf]
          %v676 = vld [vmem:[%s494 + $0x70] sm:$0xf]
          %v677 = vld [vmem:[%s494 + $0x74] sm:$0xf]
          %v678 = vld [vmem:[%s494 + $0x78] sm:$0xf]
          %v679 = vld [vmem:[%s494 + $0x7c] sm:$0xf]
          %v680 = vld [vmem:[%s494 + $0x80] sm:$0xf]
          %v681 = vld [vmem:[%s494 + $0x84] sm:$0xf]
          %v682 = vld [vmem:[%s494 + $0x88] sm:$0xf]
          %v683 = vld [vmem:[%s494 + $0x8c] sm:$0xf]
          %v684 = vld [vmem:[%s494 + $0x90] sm:$0xf]
          %v685 = vld [vmem:[%s494 + $0x94] sm:$0xf]
          %v686 = vld [vmem:[%s494 + $0x98] sm:$0xf]
          %v687 = vld [vmem:[%s494 + $0x9c] sm:$0xf]
          %v688 = vld [vmem:[%s494 + $0xa0] sm:$0xf]
          %v689 = vld [vmem:[%s494 + $0xa4] sm:$0xf]
          %v690 = vld [vmem:[%s494 + $0xa8] sm:$0xf]
          %v691 = vld [vmem:[%s494 + $0xac] sm:$0xf]
          %v692 = vld [vmem:[%s494 + $0xb0] sm:$0xf]
          %v693 = vld [vmem:[%s494 + $0xb4] sm:$0xf]
          %v694 = vld [vmem:[%s494 + $0xb8] sm:$0xf]
          %v695 = vld [vmem:[%s494 + $0xbc] sm:$0xf]
          %v696 = vld [vmem:[%s494 + $0xc0] sm:$0xf]
          %v697 = vld [vmem:[%s494 + $0xc4] sm:$0xf]
          %v698 = vld [vmem:[%s494 + $0xc8] sm:$0xf]
          %v699 = vld [vmem:[%s494 + $0xcc] sm:$0xf]
          %v700 = vld [vmem:[%s494 + $0xd0] sm:$0xf]
          %v701 = vld [vmem:[%s494 + $0xd4] sm:$0xf]
          %v702 = vld [vmem:[%s494 + $0xd8] sm:$0xf]
          %v703 = vld [vmem:[%s494 + $0xdc] sm:$0xf]
          %v704 = vld [vmem:[%s494 + $0xe0] sm:$0xf]
          %v705 = vld [vmem:[%s494 + $0xe4] sm:$0xf]
          %v706 = vld [vmem:[%s494 + $0xe8] sm:$0xf]
          %v707 = vld [vmem:[%s494 + $0xec] sm:$0xf]
          %v708 = vld [vmem:[%s494 + $0xf0] sm:$0xf]
          %v709 = vld [vmem:[%s494 + $0xf4] sm:$0xf]
          %v710 = vld [vmem:[%s494 + $0xf8] sm:$0xf]
          %v711 = vld [vmem:[%s494 + $0xfc] sm:$0xf]
          %v776 = vunpack.c.l.b16 %v584
          %v777 = vunpack.c.h.b16 %v584
          %v778 = vunpack.c.l.b16 %v585
          %v779 = vunpack.c.h.b16 %v585
          %v780 = vunpack.c.l.b16 %v586
          %v781 = vunpack.c.h.b16 %v586
          %v782 = vunpack.c.l.b16 %v587
          %v783 = vunpack.c.h.b16 %v587
          %v784 = vunpack.c.l.b16 %v588
          %v785 = vunpack.c.h.b16 %v588
          %v786 = vunpack.c.l.b16 %v589
          %v787 = vunpack.c.h.b16 %v589
          %v788 = vunpack.c.l.b16 %v590
          %v789 = vunpack.c.h.b16 %v590
          %v790 = vunpack.c.l.b16 %v591
          %v791 = vunpack.c.h.b16 %v591
          %v792 = vunpack.c.l.b16 %v592
          %v793 = vunpack.c.h.b16 %v592
          %v794 = vunpack.c.l.b16 %v593
          %v795 = vunpack.c.h.b16 %v593
          %v796 = vunpack.c.l.b16 %v594
          %v797 = vunpack.c.h.b16 %v594
          %v798 = vunpack.c.l.b16 %v595
          %v799 = vunpack.c.h.b16 %v595
          %v800 = vunpack.c.l.b16 %v596
          %v801 = vunpack.c.h.b16 %v596
          %v802 = vunpack.c.l.b16 %v597
          %v803 = vunpack.c.h.b16 %v597
          %v804 = vunpack.c.l.b16 %v598
          %v805 = vunpack.c.h.b16 %v598
          %v806 = vunpack.c.l.b16 %v599
          %v807 = vunpack.c.h.b16 %v599
          %v808 = vunpack.c.l.b16 %v600
          %v809 = vunpack.c.h.b16 %v600
          %v810 = vunpack.c.l.b16 %v601
          %v811 = vunpack.c.h.b16 %v601
          %v812 = vunpack.c.l.b16 %v602
          %v813 = vunpack.c.h.b16 %v602
          %v814 = vunpack.c.l.b16 %v603
          %v815 = vunpack.c.h.b16 %v603
          %v816 = vunpack.c.l.b16 %v604
          %v817 = vunpack.c.h.b16 %v604
          %v818 = vunpack.c.l.b16 %v605
          %v819 = vunpack.c.h.b16 %v605
          %v820 = vunpack.c.l.b16 %v606
          %v821 = vunpack.c.h.b16 %v606
          %v822 = vunpack.c.l.b16 %v607
          %v823 = vunpack.c.h.b16 %v607
          %v824 = vunpack.c.l.b16 %v608
          %v825 = vunpack.c.h.b16 %v608
          %v826 = vunpack.c.l.b16 %v609
          %v827 = vunpack.c.h.b16 %v609
          %v828 = vunpack.c.l.b16 %v610
          %v829 = vunpack.c.h.b16 %v610
          %v830 = vunpack.c.l.b16 %v611
          %v831 = vunpack.c.h.b16 %v611
          %v832 = vunpack.c.l.b16 %v612
          %v833 = vunpack.c.h.b16 %v612
          %v834 = vunpack.c.l.b16 %v613
          %v835 = vunpack.c.h.b16 %v613
          %v836 = vunpack.c.l.b16 %v614
          %v837 = vunpack.c.h.b16 %v614
          %v838 = vunpack.c.l.b16 %v615
          %v839 = vunpack.c.h.b16 %v615
          %v840 = vunpack.c.l.b16 %v616
          %v841 = vunpack.c.h.b16 %v616
          %v842 = vunpack.c.l.b16 %v617
          %v843 = vunpack.c.h.b16 %v617
          %v844 = vunpack.c.l.b16 %v618
          %v845 = vunpack.c.h.b16 %v618
          %v846 = vunpack.c.l.b16 %v619
          %v847 = vunpack.c.h.b16 %v619
          %v848 = vunpack.c.l.b16 %v620
          %v849 = vunpack.c.h.b16 %v620
          %v850 = vunpack.c.l.b16 %v621
          %v851 = vunpack.c.h.b16 %v621
          %v852 = vunpack.c.l.b16 %v622
          %v853 = vunpack.c.h.b16 %v622
          %v854 = vunpack.c.l.b16 %v623
          %v855 = vunpack.c.h.b16 %v623
          %v856 = vunpack.c.l.b16 %v624
          %v857 = vunpack.c.h.b16 %v624
          %v858 = vunpack.c.l.b16 %v625
          %v859 = vunpack.c.h.b16 %v625
          %v860 = vunpack.c.l.b16 %v626
          %v861 = vunpack.c.h.b16 %v626
          %v862 = vunpack.c.l.b16 %v627
          %v863 = vunpack.c.h.b16 %v627
          %v864 = vunpack.c.l.b16 %v628
          %v865 = vunpack.c.h.b16 %v628
          %v866 = vunpack.c.l.b16 %v629
          %v867 = vunpack.c.h.b16 %v629
          %v868 = vunpack.c.l.b16 %v630
          %v869 = vunpack.c.h.b16 %v630
          %v870 = vunpack.c.l.b16 %v631
          %v871 = vunpack.c.h.b16 %v631
          %v872 = vunpack.c.l.b16 %v632
          %v873 = vunpack.c.h.b16 %v632
          %v874 = vunpack.c.l.b16 %v633
          %v875 = vunpack.c.h.b16 %v633
          %v876 = vunpack.c.l.b16 %v634
          %v877 = vunpack.c.h.b16 %v634
          %v878 = vunpack.c.l.b16 %v635
          %v879 = vunpack.c.h.b16 %v635
          %v880 = vunpack.c.l.b16 %v636
          %v881 = vunpack.c.h.b16 %v636
          %v882 = vunpack.c.l.b16 %v637
          %v883 = vunpack.c.h.b16 %v637
          %v884 = vunpack.c.l.b16 %v638
          %v885 = vunpack.c.h.b16 %v638
          %v886 = vunpack.c.l.b16 %v639
          %v887 = vunpack.c.h.b16 %v639
          %v888 = vunpack.c.l.b16 %v640
          %v889 = vunpack.c.h.b16 %v640
          %v890 = vunpack.c.l.b16 %v641
          %v891 = vunpack.c.h.b16 %v641
          %v892 = vunpack.c.l.b16 %v642
          %v893 = vunpack.c.h.b16 %v642
          %v894 = vunpack.c.l.b16 %v643
          %v895 = vunpack.c.h.b16 %v643
          %v896 = vunpack.c.l.b16 %v644
          %v897 = vunpack.c.h.b16 %v644
          %v898 = vunpack.c.l.b16 %v645
          %v899 = vunpack.c.h.b16 %v645
          %v900 = vunpack.c.l.b16 %v646
          %v901 = vunpack.c.h.b16 %v646
          %v902 = vunpack.c.l.b16 %v647
          %v903 = vunpack.c.h.b16 %v647
          %v904 = vpack.c.b16 %v780, %v776
          %v905 = vpack.c.b16 %v781, %v777
          %v906 = vpack.c.b16 %v782, %v778
          %v907 = vpack.c.b16 %v783, %v779
          %v908 = vpack.c.b16 %v788, %v784
          %v909 = vpack.c.b16 %v789, %v785
          %v910 = vpack.c.b16 %v790, %v786
          %v911 = vpack.c.b16 %v791, %v787
          %v912 = vpack.c.b16 %v796, %v792
          %v913 = vpack.c.b16 %v797, %v793
          %v914 = vpack.c.b16 %v798, %v794
          %v915 = vpack.c.b16 %v799, %v795
          %v916 = vpack.c.b16 %v804, %v800
          %v917 = vpack.c.b16 %v805, %v801
          %v918 = vpack.c.b16 %v806, %v802
          %v919 = vpack.c.b16 %v807, %v803
          %v920 = vpack.c.b16 %v812, %v808
          %v921 = vpack.c.b16 %v813, %v809
          %v922 = vpack.c.b16 %v814, %v810
          %v923 = vpack.c.b16 %v815, %v811
          %v924 = vpack.c.b16 %v820, %v816
          %v925 = vpack.c.b16 %v821, %v817
          %v926 = vpack.c.b16 %v822, %v818
          %v927 = vpack.c.b16 %v823, %v819
          %v928 = vpack.c.b16 %v828, %v824
          %v929 = vpack.c.b16 %v829, %v825
          %v930 = vpack.c.b16 %v830, %v826
          %v931 = vpack.c.b16 %v831, %v827
          %v932 = vpack.c.b16 %v836, %v832
          %v933 = vpack.c.b16 %v837, %v833
          %v934 = vpack.c.b16 %v838, %v834
          %v935 = vpack.c.b16 %v839, %v835
          %v936 = vpack.c.b16 %v844, %v840
          %v937 = vpack.c.b16 %v845, %v841
          %v938 = vpack.c.b16 %v846, %v842
          %v939 = vpack.c.b16 %v847, %v843
          %v940 = vpack.c.b16 %v852, %v848
          %v941 = vpack.c.b16 %v853, %v849
          %v942 = vpack.c.b16 %v854, %v850
          %v943 = vpack.c.b16 %v855, %v851
          %v944 = vpack.c.b16 %v860, %v856
          %v945 = vpack.c.b16 %v861, %v857
          %v946 = vpack.c.b16 %v862, %v858
          %v947 = vpack.c.b16 %v863, %v859
          %v948 = vpack.c.b16 %v868, %v864
          %v949 = vpack.c.b16 %v869, %v865
          %v950 = vpack.c.b16 %v870, %v866
          %v951 = vpack.c.b16 %v871, %v867
          %v952 = vpack.c.b16 %v876, %v872
          %v953 = vpack.c.b16 %v877, %v873
          %v954 = vpack.c.b16 %v878, %v874
          %v955 = vpack.c.b16 %v879, %v875
          %v956 = vpack.c.b16 %v884, %v880
          %v957 = vpack.c.b16 %v885, %v881
          %v958 = vpack.c.b16 %v886, %v882
          %v959 = vpack.c.b16 %v887, %v883
          %v960 = vpack.c.b16 %v892, %v888
          %v961 = vpack.c.b16 %v893, %v889
          %v962 = vpack.c.b16 %v894, %v890
          %v963 = vpack.c.b16 %v895, %v891
          %v964 = vpack.c.b16 %v900, %v896
          %v965 = vpack.c.b16 %v901, %v897
          %v966 = vpack.c.b16 %v902, %v898
          %v967 = vpack.c.b16 %v903, %v899
          %v1096 = vunpack.c.l.b16 %v648
          %v1097 = vunpack.c.l.b16 %v649
          %v1098 = vunpack.c.l.b16 %v650
          %v1099 = vunpack.c.l.b16 %v651
          %v1100 = vunpack.c.l.b16 %v652
          %v1101 = vunpack.c.l.b16 %v653
          %v1102 = vunpack.c.l.b16 %v654
          %v1103 = vunpack.c.l.b16 %v655
          %v1104 = vunpack.c.l.b16 %v656
          %v1105 = vunpack.c.l.b16 %v657
          %v1106 = vunpack.c.l.b16 %v658
          %v1107 = vunpack.c.l.b16 %v659
          %v1108 = vunpack.c.l.b16 %v660
          %v1109 = vunpack.c.l.b16 %v661
          %v1110 = vunpack.c.l.b16 %v662
          %v1111 = vunpack.c.l.b16 %v663
          %v1112 = vunpack.c.l.b16 %v664
          %v1113 = vunpack.c.l.b16 %v665
          %v1114 = vunpack.c.l.b16 %v666
          %v1115 = vunpack.c.l.b16 %v667
          %v1116 = vunpack.c.l.b16 %v668
          %v1117 = vunpack.c.l.b16 %v669
          %v1118 = vunpack.c.l.b16 %v670
          %v1119 = vunpack.c.l.b16 %v671
          %v1120 = vunpack.c.l.b16 %v672
          %v1121 = vunpack.c.l.b16 %v673
          %v1122 = vunpack.c.l.b16 %v674
          %v1123 = vunpack.c.l.b16 %v675
          %v1124 = vunpack.c.l.b16 %v676
          %v1125 = vunpack.c.l.b16 %v677
          %v1126 = vunpack.c.l.b16 %v678
          %v1127 = vunpack.c.l.b16 %v679
          %v1128 = vunpack.c.l.b16 %v680
          %v1129 = vunpack.c.l.b16 %v681
          %v1130 = vunpack.c.l.b16 %v682
          %v1131 = vunpack.c.l.b16 %v683
          %v1132 = vunpack.c.l.b16 %v684
          %v1133 = vunpack.c.l.b16 %v685
          %v1134 = vunpack.c.l.b16 %v686
          %v1135 = vunpack.c.l.b16 %v687
          %v1136 = vunpack.c.l.b16 %v688
          %v1137 = vunpack.c.l.b16 %v689
          %v1138 = vunpack.c.l.b16 %v690
          %v1139 = vunpack.c.l.b16 %v691
          %v1140 = vunpack.c.l.b16 %v692
          %v1141 = vunpack.c.l.b16 %v693
          %v1142 = vunpack.c.l.b16 %v694
          %v1143 = vunpack.c.l.b16 %v695
          %v1144 = vunpack.c.l.b16 %v696
          %v1145 = vunpack.c.l.b16 %v697
          %v1146 = vunpack.c.l.b16 %v698
          %v1147 = vunpack.c.l.b16 %v699
          %v1148 = vunpack.c.l.b16 %v700
          %v1149 = vunpack.c.l.b16 %v701
          %v1150 = vunpack.c.l.b16 %v702
          %v1151 = vunpack.c.l.b16 %v703
          %v1152 = vunpack.c.l.b16 %v704
          %v1153 = vunpack.c.l.b16 %v705
          %v1154 = vunpack.c.l.b16 %v706
          %v1155 = vunpack.c.l.b16 %v707
          %v1156 = vunpack.c.l.b16 %v708
          %v1157 = vunpack.c.l.b16 %v709
          %v1158 = vunpack.c.l.b16 %v710
          %v1159 = vunpack.c.l.b16 %v711
          %v1160 = vpack.c.b16 %v1097, %v1096
          %v1161 = vpack.c.b16 %v1099, %v1098
          %v1162 = vpack.c.b16 %v1101, %v1100
          %v1163 = vpack.c.b16 %v1103, %v1102
          %v1164 = vpack.c.b16 %v1105, %v1104
          %v1165 = vpack.c.b16 %v1107, %v1106
          %v1166 = vpack.c.b16 %v1109, %v1108
          %v1167 = vpack.c.b16 %v1111, %v1110
          %v1168 = vpack.c.b16 %v1113, %v1112
          %v1169 = vpack.c.b16 %v1115, %v1114
          %v1170 = vpack.c.b16 %v1117, %v1116
          %v1171 = vpack.c.b16 %v1119, %v1118
          %v1172 = vpack.c.b16 %v1121, %v1120
          %v1173 = vpack.c.b16 %v1123, %v1122
          %v1174 = vpack.c.b16 %v1125, %v1124
          %v1175 = vpack.c.b16 %v1127, %v1126
          %v1176 = vpack.c.b16 %v1129, %v1128
          %v1177 = vpack.c.b16 %v1131, %v1130
          %v1178 = vpack.c.b16 %v1133, %v1132
          %v1179 = vpack.c.b16 %v1135, %v1134
          %v1180 = vpack.c.b16 %v1137, %v1136
          %v1181 = vpack.c.b16 %v1139, %v1138
          %v1182 = vpack.c.b16 %v1141, %v1140
          %v1183 = vpack.c.b16 %v1143, %v1142
          %v1184 = vpack.c.b16 %v1145, %v1144
          %v1185 = vpack.c.b16 %v1147, %v1146
          %v1186 = vpack.c.b16 %v1149, %v1148
          %v1187 = vpack.c.b16 %v1151, %v1150
          %v1188 = vpack.c.b16 %v1153, %v1152
          %v1189 = vpack.c.b16 %v1155, %v1154
          %v1190 = vpack.c.b16 %v1157, %v1156
          %v1191 = vpack.c.b16 %v1159, %v1158
          %1224 = vmatpush.bf16.msra.mxu0 %v1167
          %1225 = vmatpush.bf16.msra.mxu0 %v1166
          %1226 = vmatpush.bf16.msra.mxu0 %v1165
          %1227 = vmatpush.bf16.msra.mxu0 %v1164
          %1228 = vmatpush.bf16.msra.mxu0 %v1163
          %1229 = vmatpush.bf16.msra.mxu0 %v1162
          %1230 = vmatpush.bf16.msra.mxu0 %v1161
          %1231 = vmatpush.bf16.msra.mxu0 %v1160
          %1232 = vmatmul.bf16.gmra.mxu0 %v904
          %v1233 = vpop.f32.mrf.mxu0
          %v1234 = vadd.f32 0.0, %v1233
          %v1235 = vpop.f32.mrf.mxu0
          %v1236 = vadd.f32 0.0, %v1235
          %1237 = vmatmul.bf16.gmra.mxu0 %v908
          %v1238 = vpop.f32.mrf.mxu0
          %v1239 = vadd.f32 0.0, %v1238
          %v1240 = vpop.f32.mrf.mxu0
          %v1241 = vadd.f32 0.0, %v1240
          %1242 = vmatmul.bf16.gmra.mxu0 %v912
          %v1243 = vpop.f32.mrf.mxu0
          %v1244 = vadd.f32 0.0, %v1243
          %v1245 = vpop.f32.mrf.mxu0
          %v1246 = vadd.f32 0.0, %v1245
          %1247 = vmatmul.bf16.gmra.mxu0 %v916
          %v1248 = vpop.f32.mrf.mxu0
          %v1249 = vadd.f32 0.0, %v1248
          %v1250 = vpop.f32.mrf.mxu0
          %v1251 = vadd.f32 0.0, %v1250
          %1252 = vmatmul.bf16.gmra.mxu0 %v920
          %v1253 = vpop.f32.mrf.mxu0
          %v1254 = vadd.f32 0.0, %v1253
          %v1255 = vpop.f32.mrf.mxu0
          %v1256 = vadd.f32 0.0, %v1255
          %1257 = vmatmul.bf16.gmra.mxu0 %v924
          %v1258 = vpop.f32.mrf.mxu0
          %v1259 = vadd.f32 0.0, %v1258
          %v1260 = vpop.f32.mrf.mxu0
          %v1261 = vadd.f32 0.0, %v1260
          %1262 = vmatmul.bf16.gmra.mxu0 %v928
          %v1263 = vpop.f32.mrf.mxu0
          %v1264 = vadd.f32 0.0, %v1263
          %v1265 = vpop.f32.mrf.mxu0
          %v1266 = vadd.f32 0.0, %v1265
          %1267 = vmatmul.bf16.gmra.mxu0 %v932
          %v1268 = vpop.f32.mrf.mxu0
          %v1269 = vadd.f32 0.0, %v1268
          %v1270 = vpop.f32.mrf.mxu0
          %v1271 = vadd.f32 0.0, %v1270
          %1272 = vmatmul.bf16.gmra.mxu0 %v936
          %v1273 = vpop.f32.mrf.mxu0
          %v1274 = vadd.f32 0.0, %v1273
          %v1275 = vpop.f32.mrf.mxu0
          %v1276 = vadd.f32 0.0, %v1275
          %1277 = vmatmul.bf16.gmra.mxu0 %v940
          %v1278 = vpop.f32.mrf.mxu0
          %v1279 = vadd.f32 0.0, %v1278
          %v1280 = vpop.f32.mrf.mxu0
          %v1281 = vadd.f32 0.0, %v1280
          %1282 = vmatmul.bf16.gmra.mxu0 %v944
          %v1283 = vpop.f32.mrf.mxu0
          %v1284 = vadd.f32 0.0, %v1283
          %v1285 = vpop.f32.mrf.mxu0
          %v1286 = vadd.f32 0.0, %v1285
          %1287 = vmatmul.bf16.gmra.mxu0 %v948
          %v1288 = vpop.f32.mrf.mxu0
          %v1289 = vadd.f32 0.0, %v1288
          %v1290 = vpop.f32.mrf.mxu0
          %v1291 = vadd.f32 0.0, %v1290
          %1292 = vmatmul.bf16.gmra.mxu0 %v952
          %v1293 = vpop.f32.mrf.mxu0
          %v1294 = vadd.f32 0.0, %v1293
          %v1295 = vpop.f32.mrf.mxu0
          %v1296 = vadd.f32 0.0, %v1295
          %1297 = vmatmul.bf16.gmra.mxu0 %v956
          %v1298 = vpop.f32.mrf.mxu0
          %v1299 = vadd.f32 0.0, %v1298
          %v1300 = vpop.f32.mrf.mxu0
          %v1301 = vadd.f32 0.0, %v1300
          %1302 = vmatmul.bf16.gmra.mxu0 %v960
          %v1303 = vpop.f32.mrf.mxu0
          %v1304 = vadd.f32 0.0, %v1303
          %v1305 = vpop.f32.mrf.mxu0
          %v1306 = vadd.f32 0.0, %v1305
          %1307 = vmatmul.bf16.gmra.mxu0 %v964
          %v1308 = vpop.f32.mrf.mxu0
          %v1309 = vadd.f32 0.0, %v1308
          %v1310 = vpop.f32.mrf.mxu0
          %v1311 = vadd.f32 0.0, %v1310
          %1312 = vdwg.mxu0
          %1313 = vmatpush.bf16.msra.mxu0 %v1175
          %1314 = vmatpush.bf16.msra.mxu0 %v1174
          %1315 = vmatpush.bf16.msra.mxu0 %v1173
          %1316 = vmatpush.bf16.msra.mxu0 %v1172
          %1317 = vmatpush.bf16.msra.mxu0 %v1171
          %1318 = vmatpush.bf16.msra.mxu0 %v1170
          %1319 = vmatpush.bf16.msra.mxu0 %v1169
          %1320 = vmatpush.bf16.msra.mxu0 %v1168
          %1321 = vmatmul.bf16.gmra.mxu0 %v905
          %v1322 = vpop.f32.mrf.mxu0
          %v1323 = vadd.f32 %v1234, %v1322
          %v1324 = vpop.f32.mrf.mxu0
          %v1325 = vadd.f32 %v1236, %v1324
          %1326 = vmatmul.bf16.gmra.mxu0 %v909
          %v1327 = vpop.f32.mrf.mxu0
          %v1328 = vadd.f32 %v1239, %v1327
          %v1329 = vpop.f32.mrf.mxu0
          %v1330 = vadd.f32 %v1241, %v1329
          %1331 = vmatmul.bf16.gmra.mxu0 %v913
          %v1332 = vpop.f32.mrf.mxu0
          %v1333 = vadd.f32 %v1244, %v1332
          %v1334 = vpop.f32.mrf.mxu0
          %v1335 = vadd.f32 %v1246, %v1334
          %1336 = vmatmul.bf16.gmra.mxu0 %v917
          %v1337 = vpop.f32.mrf.mxu0
          %v1338 = vadd.f32 %v1249, %v1337
          %v1339 = vpop.f32.mrf.mxu0
          %v1340 = vadd.f32 %v1251, %v1339
          %1341 = vmatmul.bf16.gmra.mxu0 %v921
          %v1342 = vpop.f32.mrf.mxu0
          %v1343 = vadd.f32 %v1254, %v1342
          %v1344 = vpop.f32.mrf.mxu0
          %v1345 = vadd.f32 %v1256, %v1344
          %1346 = vmatmul.bf16.gmra.mxu0 %v925
          %v1347 = vpop.f32.mrf.mxu0
          %v1348 = vadd.f32 %v1259, %v1347
          %v1349 = vpop.f32.mrf.mxu0
          %v1350 = vadd.f32 %v1261, %v1349
          %1351 = vmatmul.bf16.gmra.mxu0 %v929
          %v1352 = vpop.f32.mrf.mxu0
          %v1353 = vadd.f32 %v1264, %v1352
          %v1354 = vpop.f32.mrf.mxu0
          %v1355 = vadd.f32 %v1266, %v1354
          %1356 = vmatmul.bf16.gmra.mxu0 %v933
          %v1357 = vpop.f32.mrf.mxu0
          %v1358 = vadd.f32 %v1269, %v1357
          %v1359 = vpop.f32.mrf.mxu0
          %v1360 = vadd.f32 %v1271, %v1359
          %1361 = vmatmul.bf16.gmra.mxu0 %v937
          %v1362 = vpop.f32.mrf.mxu0
          %v1363 = vadd.f32 %v1274, %v1362
          %v1364 = vpop.f32.mrf.mxu0
          %v1365 = vadd.f32 %v1276, %v1364
          %1366 = vmatmul.bf16.gmra.mxu0 %v941
          %v1367 = vpop.f32.mrf.mxu0
          %v1368 = vadd.f32 %v1279, %v1367
          %v1369 = vpop.f32.mrf.mxu0
          %v1370 = vadd.f32 %v1281, %v1369
          %1371 = vmatmul.bf16.gmra.mxu0 %v945
          %v1372 = vpop.f32.mrf.mxu0
          %v1373 = vadd.f32 %v1284, %v1372
          %v1374 = vpop.f32.mrf.mxu0
          %v1375 = vadd.f32 %v1286, %v1374
          %1376 = vmatmul.bf16.gmra.mxu0 %v949
          %v1377 = vpop.f32.mrf.mxu0
          %v1378 = vadd.f32 %v1289, %v1377
          %v1379 = vpop.f32.mrf.mxu0
          %v1380 = vadd.f32 %v1291, %v1379
          %1381 = vmatmul.bf16.gmra.mxu0 %v953
          %v1382 = vpop.f32.mrf.mxu0
          %v1383 = vadd.f32 %v1294, %v1382
          %v1384 = vpop.f32.mrf.mxu0
          %v1385 = vadd.f32 %v1296, %v1384
          %1386 = vmatmul.bf16.gmra.mxu0 %v957
          %v1387 = vpop.f32.mrf.mxu0
          %v1388 = vadd.f32 %v1299, %v1387
          %v1389 = vpop.f32.mrf.mxu0
          %v1390 = vadd.f32 %v1301, %v1389
          %1391 = vmatmul.bf16.gmra.mxu0 %v961
          %v1392 = vpop.f32.mrf.mxu0
          %v1393 = vadd.f32 %v1304, %v1392
          %v1394 = vpop.f32.mrf.mxu0
          %v1395 = vadd.f32 %v1306, %v1394
          %1396 = vmatmul.bf16.gmra.mxu0 %v965
          %v1397 = vpop.f32.mrf.mxu0
          %v1398 = vadd.f32 %v1309, %v1397
          %v1399 = vpop.f32.mrf.mxu0
          %v1400 = vadd.f32 %v1311, %v1399
          %1401 = vdwg.mxu0
          %1402 = vmatpush.bf16.msra.mxu0 %v1183
          %1403 = vmatpush.bf16.msra.mxu0 %v1182
          %1404 = vmatpush.bf16.msra.mxu0 %v1181
          %1405 = vmatpush.bf16.msra.mxu0 %v1180
          %1406 = vmatpush.bf16.msra.mxu0 %v1179
          %1407 = vmatpush.bf16.msra.mxu0 %v1178
          %1408 = vmatpush.bf16.msra.mxu0 %v1177
          %1409 = vmatpush.bf16.msra.mxu0 %v1176
          %1410 = vmatmul.bf16.gmra.mxu0 %v906
          %v1411 = vpop.f32.mrf.mxu0
          %v1412 = vadd.f32 %v1323, %v1411
          %v1413 = vpop.f32.mrf.mxu0
          %v1414 = vadd.f32 %v1325, %v1413
          %1415 = vmatmul.bf16.gmra.mxu0 %v910
          %v1416 = vpop.f32.mrf.mxu0
          %v1417 = vadd.f32 %v1328, %v1416
          %v1418 = vpop.f32.mrf.mxu0
          %v1419 = vadd.f32 %v1330, %v1418
          %1420 = vmatmul.bf16.gmra.mxu0 %v914
          %v1421 = vpop.f32.mrf.mxu0
          %v1422 = vadd.f32 %v1333, %v1421
          %v1423 = vpop.f32.mrf.mxu0
          %v1424 = vadd.f32 %v1335, %v1423
          %1425 = vmatmul.bf16.gmra.mxu0 %v918
          %v1426 = vpop.f32.mrf.mxu0
          %v1427 = vadd.f32 %v1338, %v1426
          %v1428 = vpop.f32.mrf.mxu0
          %v1429 = vadd.f32 %v1340, %v1428
          %1430 = vmatmul.bf16.gmra.mxu0 %v922
          %v1431 = vpop.f32.mrf.mxu0
          %v1432 = vadd.f32 %v1343, %v1431
          %v1433 = vpop.f32.mrf.mxu0
          %v1434 = vadd.f32 %v1345, %v1433
          %1435 = vmatmul.bf16.gmra.mxu0 %v926
          %v1436 = vpop.f32.mrf.mxu0
          %v1437 = vadd.f32 %v1348, %v1436
          %v1438 = vpop.f32.mrf.mxu0
          %v1439 = vadd.f32 %v1350, %v1438
          %1440 = vmatmul.bf16.gmra.mxu0 %v930
          %v1441 = vpop.f32.mrf.mxu0
          %v1442 = vadd.f32 %v1353, %v1441
          %v1443 = vpop.f32.mrf.mxu0
          %v1444 = vadd.f32 %v1355, %v1443
          %1445 = vmatmul.bf16.gmra.mxu0 %v934
          %v1446 = vpop.f32.mrf.mxu0
          %v1447 = vadd.f32 %v1358, %v1446
          %v1448 = vpop.f32.mrf.mxu0
          %v1449 = vadd.f32 %v1360, %v1448
          %1450 = vmatmul.bf16.gmra.mxu0 %v938
          %v1451 = vpop.f32.mrf.mxu0
          %v1452 = vadd.f32 %v1363, %v1451
          %v1453 = vpop.f32.mrf.mxu0
          %v1454 = vadd.f32 %v1365, %v1453
          %1455 = vmatmul.bf16.gmra.mxu0 %v942
          %v1456 = vpop.f32.mrf.mxu0
          %v1457 = vadd.f32 %v1368, %v1456
          %v1458 = vpop.f32.mrf.mxu0
          %v1459 = vadd.f32 %v1370, %v1458
          %1460 = vmatmul.bf16.gmra.mxu0 %v946
          %v1461 = vpop.f32.mrf.mxu0
          %v1462 = vadd.f32 %v1373, %v1461
          %v1463 = vpop.f32.mrf.mxu0
          %v1464 = vadd.f32 %v1375, %v1463
          %1465 = vmatmul.bf16.gmra.mxu0 %v950
          %v1466 = vpop.f32.mrf.mxu0
          %v1467 = vadd.f32 %v1378, %v1466
          %v1468 = vpop.f32.mrf.mxu0
          %v1469 = vadd.f32 %v1380, %v1468
          %1470 = vmatmul.bf16.gmra.mxu0 %v954
          %v1471 = vpop.f32.mrf.mxu0
          %v1472 = vadd.f32 %v1383, %v1471
          %v1473 = vpop.f32.mrf.mxu0
          %v1474 = vadd.f32 %v1385, %v1473
          %1475 = vmatmul.bf16.gmra.mxu0 %v958
          %v1476 = vpop.f32.mrf.mxu0
          %v1477 = vadd.f32 %v1388, %v1476
          %v1478 = vpop.f32.mrf.mxu0
          %v1479 = vadd.f32 %v1390, %v1478
          %1480 = vmatmul.bf16.gmra.mxu0 %v962
          %v1481 = vpop.f32.mrf.mxu0
          %v1482 = vadd.f32 %v1393, %v1481
          %v1483 = vpop.f32.mrf.mxu0
          %v1484 = vadd.f32 %v1395, %v1483
          %1485 = vmatmul.bf16.gmra.mxu0 %v966
          %v1486 = vpop.f32.mrf.mxu0
          %v1487 = vadd.f32 %v1398, %v1486
          %v1488 = vpop.f32.mrf.mxu0
          %v1489 = vadd.f32 %v1400, %v1488
          %1490 = vdwg.mxu0
          %1491 = vmatpush.bf16.msra.mxu0 %v1191
          %1492 = vmatpush.bf16.msra.mxu0 %v1190
          %1493 = vmatpush.bf16.msra.mxu0 %v1189
          %1494 = vmatpush.bf16.msra.mxu0 %v1188
          %1495 = vmatpush.bf16.msra.mxu0 %v1187
          %1496 = vmatpush.bf16.msra.mxu0 %v1186
          %1497 = vmatpush.bf16.msra.mxu0 %v1185
          %1498 = vmatpush.bf16.msra.mxu0 %v1184
          %1499 = vmatmul.bf16.gmra.mxu0 %v907
          %v1500 = vpop.f32.mrf.mxu0
          %v1501 = vadd.f32 %v1412, %v1500
          %v1502 = vpop.f32.mrf.mxu0
          %v1503 = vadd.f32 %v1414, %v1502
          %1504 = vmatmul.bf16.gmra.mxu0 %v911
          %v1505 = vpop.f32.mrf.mxu0
          %v1506 = vadd.f32 %v1417, %v1505
          %v1507 = vpop.f32.mrf.mxu0
          %v1508 = vadd.f32 %v1419, %v1507
          %1509 = vmatmul.bf16.gmra.mxu0 %v915
          %v1510 = vpop.f32.mrf.mxu0
          %v1511 = vadd.f32 %v1422, %v1510
          %v1512 = vpop.f32.mrf.mxu0
          %v1513 = vadd.f32 %v1424, %v1512
          %1514 = vmatmul.bf16.gmra.mxu0 %v919
          %v1515 = vpop.f32.mrf.mxu0
          %v1516 = vadd.f32 %v1427, %v1515
          %v1517 = vpop.f32.mrf.mxu0
          %v1518 = vadd.f32 %v1429, %v1517
          %1519 = vmatmul.bf16.gmra.mxu0 %v923
          %v1520 = vpop.f32.mrf.mxu0
          %v1521 = vadd.f32 %v1432, %v1520
          %v1522 = vpop.f32.mrf.mxu0
          %v1523 = vadd.f32 %v1434, %v1522
          %1524 = vmatmul.bf16.gmra.mxu0 %v927
          %v1525 = vpop.f32.mrf.mxu0
          %v1526 = vadd.f32 %v1437, %v1525
          %v1527 = vpop.f32.mrf.mxu0
          %v1528 = vadd.f32 %v1439, %v1527
          %1529 = vmatmul.bf16.gmra.mxu0 %v931
          %v1530 = vpop.f32.mrf.mxu0
          %v1531 = vadd.f32 %v1442, %v1530
          %v1532 = vpop.f32.mrf.mxu0
          %v1533 = vadd.f32 %v1444, %v1532
          %1534 = vmatmul.bf16.gmra.mxu0 %v935
          %v1535 = vpop.f32.mrf.mxu0
          %v1536 = vadd.f32 %v1447, %v1535
          %v1537 = vpop.f32.mrf.mxu0
          %v1538 = vadd.f32 %v1449, %v1537
          %1539 = vmatmul.bf16.gmra.mxu0 %v939
          %v1540 = vpop.f32.mrf.mxu0
          %v1541 = vadd.f32 %v1452, %v1540
          %v1542 = vpop.f32.mrf.mxu0
          %v1543 = vadd.f32 %v1454, %v1542
          %1544 = vmatmul.bf16.gmra.mxu0 %v943
          %v1545 = vpop.f32.mrf.mxu0
          %v1546 = vadd.f32 %v1457, %v1545
          %v1547 = vpop.f32.mrf.mxu0
          %v1548 = vadd.f32 %v1459, %v1547
          %1549 = vmatmul.bf16.gmra.mxu0 %v947
          %v1550 = vpop.f32.mrf.mxu0
          %v1551 = vadd.f32 %v1462, %v1550
          %v1552 = vpop.f32.mrf.mxu0
          %v1553 = vadd.f32 %v1464, %v1552
          %1554 = vmatmul.bf16.gmra.mxu0 %v951
          %v1555 = vpop.f32.mrf.mxu0
          %v1556 = vadd.f32 %v1467, %v1555
          %v1557 = vpop.f32.mrf.mxu0
          %v1558 = vadd.f32 %v1469, %v1557
          %1559 = vmatmul.bf16.gmra.mxu0 %v955
          %v1560 = vpop.f32.mrf.mxu0
          %v1561 = vadd.f32 %v1472, %v1560
          %v1562 = vpop.f32.mrf.mxu0
          %v1563 = vadd.f32 %v1474, %v1562
          %1564 = vmatmul.bf16.gmra.mxu0 %v959
          %v1565 = vpop.f32.mrf.mxu0
          %v1566 = vadd.f32 %v1477, %v1565
          %v1567 = vpop.f32.mrf.mxu0
          %v1568 = vadd.f32 %v1479, %v1567
          %1569 = vmatmul.bf16.gmra.mxu0 %v963
          %v1570 = vpop.f32.mrf.mxu0
          %v1571 = vadd.f32 %v1482, %v1570
          %v1572 = vpop.f32.mrf.mxu0
          %v1573 = vadd.f32 %v1484, %v1572
          %1574 = vmatmul.bf16.gmra.mxu0 %v967
          %v1575 = vpop.f32.mrf.mxu0
          %v1576 = vadd.f32 %v1487, %v1575
          %v1577 = vpop.f32.mrf.mxu0
          %v1578 = vadd.f32 %v1489, %v1577
          %1579 = vdwg.mxu0
          %v1580 = vadd.f32 %v552, %v1501
          %v1581 = vadd.f32 %v553, %v1503
          %v1582 = vadd.f32 %v554, %v1506
          %v1583 = vadd.f32 %v555, %v1508
          %v1584 = vadd.f32 %v556, %v1511
          %v1585 = vadd.f32 %v557, %v1513
          %v1586 = vadd.f32 %v558, %v1516
          %v1587 = vadd.f32 %v559, %v1518
          %v1588 = vadd.f32 %v560, %v1521
          %v1589 = vadd.f32 %v561, %v1523
          %v1590 = vadd.f32 %v562, %v1526
          %v1591 = vadd.f32 %v563, %v1528
          %v1592 = vadd.f32 %v564, %v1531
          %v1593 = vadd.f32 %v565, %v1533
          %v1594 = vadd.f32 %v566, %v1536
          %v1595 = vadd.f32 %v567, %v1538
          %v1596 = vadd.f32 %v568, %v1541
          %v1597 = vadd.f32 %v569, %v1543
          %v1598 = vadd.f32 %v570, %v1546
          %v1599 = vadd.f32 %v571, %v1548
          %v1600 = vadd.f32 %v572, %v1551
          %v1601 = vadd.f32 %v573, %v1553
          %v1602 = vadd.f32 %v574, %v1556
          %v1603 = vadd.f32 %v575, %v1558
          %v1604 = vadd.f32 %v576, %v1561
          %v1605 = vadd.f32 %v577, %v1563
          %v1606 = vadd.f32 %v578, %v1566
          %v1607 = vadd.f32 %v579, %v1568
          %v1608 = vadd.f32 %v580, %v1571
          %v1609 = vadd.f32 %v581, %v1573
          %v1610 = vadd.f32 %v582, %v1576
          %v1611 = vadd.f32 %v583, %v1578
          %1612 = vst [vmem:[#allocation2] sm:$0xff] %v1580
          %1613 = vst [vmem:[#allocation2 + $0x8] sm:$0xff] %v1581
          %1614 = vst [vmem:[#allocation2 + $0x10] sm:$0xff] %v1582
          %1615 = vst [vmem:[#allocation2 + $0x18] sm:$0xff] %v1583
          %1616 = vst [vmem:[#allocation2 + $0x20] sm:$0xff] %v1584
          %1617 = vst [vmem:[#allocation2 + $0x28] sm:$0xff] %v1585
          %1618 = vst [vmem:[#allocation2 + $0x30] sm:$0xff] %v1586
          %1619 = vst [vmem:[#allocation2 + $0x38] sm:$0xff] %v1587
          %1620 = vst [vmem:[#allocation2 + $0x40] sm:$0xff] %v1588
          %1621 = vst [vmem:[#allocation2 + $0x48] sm:$0xff] %v1589
          %1622 = vst [vmem:[#allocation2 + $0x50] sm:$0xff] %v1590
          %1623 = vst [vmem:[#allocation2 + $0x58] sm:$0xff] %v1591
          %1624 = vst [vmem:[#allocation2 + $0x60] sm:$0xff] %v1592
          %1625 = vst [vmem:[#allocation2 + $0x68] sm:$0xff] %v1593
          %1626 = vst [vmem:[#allocation2 + $0x70] sm:$0xff] %v1594
          %1627 = vst [vmem:[#allocation2 + $0x78] sm:$0xff] %v1595
          %1628 = vst [vmem:[#allocation2 + $0x80] sm:$0xff] %v1596
          %1629 = vst [vmem:[#allocation2 + $0x88] sm:$0xff] %v1597
          %1630 = vst [vmem:[#allocation2 + $0x90] sm:$0xff] %v1598
          %1631 = vst [vmem:[#allocation2 + $0x98] sm:$0xff] %v1599
          %1632 = vst [vmem:[#allocation2 + $0xa0] sm:$0xff] %v1600
          %1633 = vst [vmem:[#allocation2 + $0xa8] sm:$0xff] %v1601
          %1634 = vst [vmem:[#allocation2 + $0xb0] sm:$0xff] %v1602
          %1635 = vst [vmem:[#allocation2 + $0xb8] sm:$0xff] %v1603
          %1636 = vst [vmem:[#allocation2 + $0xc0] sm:$0xff] %v1604
          %1637 = vst [vmem:[#allocation2 + $0xc8] sm:$0xff] %v1605
          %1638 = vst [vmem:[#allocation2 + $0xd0] sm:$0xff] %v1606
          %1639 = vst [vmem:[#allocation2 + $0xd8] sm:$0xff] %v1607
          %1640 = vst [vmem:[#allocation2 + $0xe0] sm:$0xff] %v1608
          %1641 = vst [vmem:[#allocation2 + $0xe8] sm:$0xff] %v1609
          %1642 = vst [vmem:[#allocation2 + $0xf0] sm:$0xff] %v1610
          %1643 = vst [vmem:[#allocation2 + $0xf8] sm:$0xff] %v1611
        $region75: #{drew_gnn_stage.1} parent=62 // pred_fallthru
          _
        %p1644 = scmp.eq.s32.totalorder %s38, 1
        // Predicated region
        $region76: #{drew_gnn_stage.1} parent=62 // pred_check
          %p1645 = pneg %p1644
        $region77: #{drew_gnn_stage.1} parent=62 // pred_check_branch
          %1647 = sbr.rel (%p1645) target = $region79
        $region78: #{drew_gnn_stage.1} parent=62 // pred_region
          %v1648 = vld [vmem:[#allocation2] sm:$0xff]
          %v1649 = vld [vmem:[#allocation2 + $0x8] sm:$0xff]
          %v1650 = vld [vmem:[#allocation2 + $0x10] sm:$0xff]
          %v1651 = vld [vmem:[#allocation2 + $0x18] sm:$0xff]
          %v1652 = vld [vmem:[#allocation2 + $0x20] sm:$0xff]
          %v1653 = vld [vmem:[#allocation2 + $0x28] sm:$0xff]
          %v1654 = vld [vmem:[#allocation2 + $0x30] sm:$0xff]
          %v1655 = vld [vmem:[#allocation2 + $0x38] sm:$0xff]
          %v1656 = vld [vmem:[#allocation2 + $0x40] sm:$0xff]
          %v1657 = vld [vmem:[#allocation2 + $0x48] sm:$0xff]
          %v1658 = vld [vmem:[#allocation2 + $0x50] sm:$0xff]
          %v1659 = vld [vmem:[#allocation2 + $0x58] sm:$0xff]
          %v1660 = vld [vmem:[#allocation2 + $0x60] sm:$0xff]
          %v1661 = vld [vmem:[#allocation2 + $0x68] sm:$0xff]
          %v1662 = vld [vmem:[#allocation2 + $0x70] sm:$0xff]
          %v1663 = vld [vmem:[#allocation2 + $0x78] sm:$0xff]
          %v1664 = vld [vmem:[#allocation2 + $0x80] sm:$0xff]
          %v1665 = vld [vmem:[#allocation2 + $0x88] sm:$0xff]
          %v1666 = vld [vmem:[#allocation2 + $0x90] sm:$0xff]
          %v1667 = vld [vmem:[#allocation2 + $0x98] sm:$0xff]
          %v1668 = vld [vmem:[#allocation2 + $0xa0] sm:$0xff]
          %v1669 = vld [vmem:[#allocation2 + $0xa8] sm:$0xff]
          %v1670 = vld [vmem:[#allocation2 + $0xb0] sm:$0xff]
          %v1671 = vld [vmem:[#allocation2 + $0xb8] sm:$0xff]
          %v1672 = vld [vmem:[#allocation2 + $0xc0] sm:$0xff]
          %v1673 = vld [vmem:[#allocation2 + $0xc8] sm:$0xff]
          %v1674 = vld [vmem:[#allocation2 + $0xd0] sm:$0xff]
          %v1675 = vld [vmem:[#allocation2 + $0xd8] sm:$0xff]
          %v1676 = vld [vmem:[#allocation2 + $0xe0] sm:$0xff]
          %v1677 = vld [vmem:[#allocation2 + $0xe8] sm:$0xff]
          %v1678 = vld [vmem:[#allocation2 + $0xf0] sm:$0xff]
          %v1679 = vld [vmem:[#allocation2 + $0xf8] sm:$0xff]
          %v1680 = vpack.c.bf16 %v1649, %v1648
          %v1681 = vpack.c.bf16 %v1651, %v1650
          %v1682 = vpack.c.bf16 %v1653, %v1652
          %v1683 = vpack.c.bf16 %v1655, %v1654
          %v1684 = vpack.c.bf16 %v1657, %v1656
          %v1685 = vpack.c.bf16 %v1659, %v1658
          %v1686 = vpack.c.bf16 %v1661, %v1660
          %v1687 = vpack.c.bf16 %v1663, %v1662
          %v1688 = vpack.c.bf16 %v1665, %v1664
          %v1689 = vpack.c.bf16 %v1667, %v1666
          %v1690 = vpack.c.bf16 %v1669, %v1668
          %v1691 = vpack.c.bf16 %v1671, %v1670
          %v1692 = vpack.c.bf16 %v1673, %v1672
          %v1693 = vpack.c.bf16 %v1675, %v1674
          %v1694 = vpack.c.bf16 %v1677, %v1676
          %v1695 = vpack.c.bf16 %v1679, %v1678
          %v1696 = vld [vmem:[%s5] sm:$0xf]
          %v1697 = vld [vmem:[%s5 + $0x4] sm:$0xf]
          %v1698 = vld [vmem:[%s5 + $0x8] sm:$0xf]
          %v1699 = vld [vmem:[%s5 + $0xc] sm:$0xf]
          %v1700 = vld [vmem:[%s5 + $0x10] sm:$0xf]
          %v1701 = vld [vmem:[%s5 + $0x14] sm:$0xf]
          %v1702 = vld [vmem:[%s5 + $0x18] sm:$0xf]
          %v1703 = vld [vmem:[%s5 + $0x1c] sm:$0xf]
          %v1704 = vld [vmem:[%s5 + $0x20] sm:$0xf]
          %v1705 = vld [vmem:[%s5 + $0x24] sm:$0xf]
          %v1706 = vld [vmem:[%s5 + $0x28] sm:$0xf]
          %v1707 = vld [vmem:[%s5 + $0x2c] sm:$0xf]
          %v1708 = vld [vmem:[%s5 + $0x30] sm:$0xf]
          %v1709 = vld [vmem:[%s5 + $0x34] sm:$0xf]
          %v1710 = vld [vmem:[%s5 + $0x38] sm:$0xf]
          %v1711 = vld [vmem:[%s5 + $0x3c] sm:$0xf]
          %v1712 = vld [vmem:[%s6] sm:$0x1]
          %v1714 = vperm.slane %v1712, 0
          %v1732 = vunpack.c.l.b16 %v1696
          %v1733 = vunpack.c.l.b16 %v1697
          %v1734 = vunpack.c.l.b16 %v1698
          %v1735 = vunpack.c.l.b16 %v1699
          %v1736 = vunpack.c.l.b16 %v1700
          %v1737 = vunpack.c.l.b16 %v1701
          %v1738 = vunpack.c.l.b16 %v1702
          %v1739 = vunpack.c.l.b16 %v1703
          %v1740 = vunpack.c.l.b16 %v1704
          %v1741 = vunpack.c.l.b16 %v1705
          %v1742 = vunpack.c.l.b16 %v1706
          %v1743 = vunpack.c.l.b16 %v1707
          %v1744 = vunpack.c.l.b16 %v1708
          %v1745 = vunpack.c.l.b16 %v1709
          %v1746 = vunpack.c.l.b16 %v1710
          %v1747 = vunpack.c.l.b16 %v1711
          %v1748 = vpack.c.b16 %v1733, %v1732
          %v1749 = vpack.c.b16 %v1735, %v1734
          %v1750 = vpack.c.b16 %v1737, %v1736
          %v1751 = vpack.c.b16 %v1739, %v1738
          %v1752 = vpack.c.b16 %v1741, %v1740
          %v1753 = vpack.c.b16 %v1743, %v1742
          %v1754 = vpack.c.b16 %v1745, %v1744
          %v1755 = vpack.c.b16 %v1747, %v1746
          %1764 = vmatpush.bf16.msra.mxu0 %v1755
          %1765 = vmatpush.bf16.msra.mxu0 %v1754
          %1766 = vmatpush.bf16.msra.mxu0 %v1753
          %1767 = vmatpush.bf16.msra.mxu0 %v1752
          %1768 = vmatpush.bf16.msra.mxu0 %v1751
          %1769 = vmatpush.bf16.msra.mxu0 %v1750
          %1770 = vmatpush.bf16.msra.mxu0 %v1749
          %1771 = vmatpush.bf16.msra.mxu0 %v1748
          %1772 = vmatmul.bf16.gmra.mxu0 %v1680
          %v1773 = vpop.f32.mrf.mxu0
          %v1774 = vadd.f32 %v1714, %v1773
          %v1775 = vpop.f32.mrf.mxu0
          %v1776 = vadd.f32 %v1714, %v1775
          %1777 = vmatmul.bf16.gmra.mxu0 %v1681
          %v1778 = vpop.f32.mrf.mxu0
          %v1779 = vadd.f32 %v1714, %v1778
          %v1780 = vpop.f32.mrf.mxu0
          %v1781 = vadd.f32 %v1714, %v1780
          %1782 = vmatmul.bf16.gmra.mxu0 %v1682
          %v1783 = vpop.f32.mrf.mxu0
          %v1784 = vadd.f32 %v1714, %v1783
          %v1785 = vpop.f32.mrf.mxu0
          %v1786 = vadd.f32 %v1714, %v1785
          %1787 = vmatmul.bf16.gmra.mxu0 %v1683
          %v1788 = vpop.f32.mrf.mxu0
          %v1789 = vadd.f32 %v1714, %v1788
          %v1790 = vpop.f32.mrf.mxu0
          %v1791 = vadd.f32 %v1714, %v1790
          %1792 = vmatmul.bf16.gmra.mxu0 %v1684
          %v1793 = vpop.f32.mrf.mxu0
          %v1794 = vadd.f32 %v1714, %v1793
          %v1795 = vpop.f32.mrf.mxu0
          %v1796 = vadd.f32 %v1714, %v1795
          %1797 = vmatmul.bf16.gmra.mxu0 %v1685
          %v1798 = vpop.f32.mrf.mxu0
          %v1799 = vadd.f32 %v1714, %v1798
          %v1800 = vpop.f32.mrf.mxu0
          %v1801 = vadd.f32 %v1714, %v1800
          %1802 = vmatmul.bf16.gmra.mxu0 %v1686
          %v1803 = vpop.f32.mrf.mxu0
          %v1804 = vadd.f32 %v1714, %v1803
          %v1805 = vpop.f32.mrf.mxu0
          %v1806 = vadd.f32 %v1714, %v1805
          %1807 = vmatmul.bf16.gmra.mxu0 %v1687
          %v1808 = vpop.f32.mrf.mxu0
          %v1809 = vadd.f32 %v1714, %v1808
          %v1810 = vpop.f32.mrf.mxu0
          %v1811 = vadd.f32 %v1714, %v1810
          %1812 = vmatmul.bf16.gmra.mxu0 %v1688
          %v1813 = vpop.f32.mrf.mxu0
          %v1814 = vadd.f32 %v1714, %v1813
          %v1815 = vpop.f32.mrf.mxu0
          %v1816 = vadd.f32 %v1714, %v1815
          %1817 = vmatmul.bf16.gmra.mxu0 %v1689
          %v1818 = vpop.f32.mrf.mxu0
          %v1819 = vadd.f32 %v1714, %v1818
          %v1820 = vpop.f32.mrf.mxu0
          %v1821 = vadd.f32 %v1714, %v1820
          %1822 = vmatmul.bf16.gmra.mxu0 %v1690
          %v1823 = vpop.f32.mrf.mxu0
          %v1824 = vadd.f32 %v1714, %v1823
          %v1825 = vpop.f32.mrf.mxu0
          %v1826 = vadd.f32 %v1714, %v1825
          %1827 = vmatmul.bf16.gmra.mxu0 %v1691
          %v1828 = vpop.f32.mrf.mxu0
          %v1829 = vadd.f32 %v1714, %v1828
          %v1830 = vpop.f32.mrf.mxu0
          %v1831 = vadd.f32 %v1714, %v1830
          %1832 = vmatmul.bf16.gmra.mxu0 %v1692
          %v1833 = vpop.f32.mrf.mxu0
          %v1834 = vadd.f32 %v1714, %v1833
          %v1835 = vpop.f32.mrf.mxu0
          %v1836 = vadd.f32 %v1714, %v1835
          %1837 = vmatmul.bf16.gmra.mxu0 %v1693
          %v1838 = vpop.f32.mrf.mxu0
          %v1839 = vadd.f32 %v1714, %v1838
          %v1840 = vpop.f32.mrf.mxu0
          %v1841 = vadd.f32 %v1714, %v1840
          %1842 = vmatmul.bf16.gmra.mxu0 %v1694
          %v1843 = vpop.f32.mrf.mxu0
          %v1844 = vadd.f32 %v1714, %v1843
          %v1845 = vpop.f32.mrf.mxu0
          %v1846 = vadd.f32 %v1714, %v1845
          %1847 = vmatmul.bf16.gmra.mxu0 %v1695
          %v1848 = vpop.f32.mrf.mxu0
          %v1849 = vadd.f32 %v1714, %v1848
          %v1850 = vpop.f32.mrf.mxu0
          %v1851 = vadd.f32 %v1714, %v1850
          %1852 = vdwg.mxu0
          %v1853 = vld [vmem:[%s503] sm:$0xff]
          %v1854 = vld [vmem:[%s503 + $0x8] sm:$0xff]
          %v1855 = vld [vmem:[%s503 + $0x10] sm:$0xff]
          %v1856 = vld [vmem:[%s503 + $0x18] sm:$0xff]
          %v1857 = vld [vmem:[%s503 + $0x20] sm:$0xff]
          %v1858 = vld [vmem:[%s503 + $0x28] sm:$0xff]
          %v1859 = vld [vmem:[%s503 + $0x30] sm:$0xff]
          %v1860 = vld [vmem:[%s503 + $0x38] sm:$0xff]
          %v1861 = vld [vmem:[%s503 + $0x40] sm:$0xff]
          %v1862 = vld [vmem:[%s503 + $0x48] sm:$0xff]
          %v1863 = vld [vmem:[%s503 + $0x50] sm:$0xff]
          %v1864 = vld [vmem:[%s503 + $0x58] sm:$0xff]
          %v1865 = vld [vmem:[%s503 + $0x60] sm:$0xff]
          %v1866 = vld [vmem:[%s503 + $0x68] sm:$0xff]
          %v1867 = vld [vmem:[%s503 + $0x70] sm:$0xff]
          %v1868 = vld [vmem:[%s503 + $0x78] sm:$0xff]
          %v1869 = vld [vmem:[%s503 + $0x80] sm:$0xff]
          %v1870 = vld [vmem:[%s503 + $0x88] sm:$0xff]
          %v1871 = vld [vmem:[%s503 + $0x90] sm:$0xff]
          %v1872 = vld [vmem:[%s503 + $0x98] sm:$0xff]
          %v1873 = vld [vmem:[%s503 + $0xa0] sm:$0xff]
          %v1874 = vld [vmem:[%s503 + $0xa8] sm:$0xff]
          %v1875 = vld [vmem:[%s503 + $0xb0] sm:$0xff]
          %v1876 = vld [vmem:[%s503 + $0xb8] sm:$0xff]
          %v1877 = vld [vmem:[%s503 + $0xc0] sm:$0xff]
          %v1878 = vld [vmem:[%s503 + $0xc8] sm:$0xff]
          %v1879 = vld [vmem:[%s503 + $0xd0] sm:$0xff]
          %v1880 = vld [vmem:[%s503 + $0xd8] sm:$0xff]
          %v1881 = vld [vmem:[%s503 + $0xe0] sm:$0xff]
          %v1882 = vld [vmem:[%s503 + $0xe8] sm:$0xff]
          %v1883 = vld [vmem:[%s503 + $0xf0] sm:$0xff]
          %v1884 = vld [vmem:[%s503 + $0xf8] sm:$0xff]
          %s1885 = sld [smem:[#allocation6]]
          %v1886 = vstv %s1885
          %v1887 = vmul.f32 %v1886, %v1774
          %v1888 = vmul.f32 %v1886, %v1776
          %v1889 = vmul.f32 %v1886, %v1779
          %v1890 = vmul.f32 %v1886, %v1781
          %v1891 = vmul.f32 %v1886, %v1784
          %v1892 = vmul.f32 %v1886, %v1786
          %v1893 = vmul.f32 %v1886, %v1789
          %v1894 = vmul.f32 %v1886, %v1791
          %v1895 = vmul.f32 %v1886, %v1794
          %v1896 = vmul.f32 %v1886, %v1796
          %v1897 = vmul.f32 %v1886, %v1799
          %v1898 = vmul.f32 %v1886, %v1801
          %v1899 = vmul.f32 %v1886, %v1804
          %v1900 = vmul.f32 %v1886, %v1806
          %v1901 = vmul.f32 %v1886, %v1809
          %v1902 = vmul.f32 %v1886, %v1811
          %v1903 = vmul.f32 %v1886, %v1814
          %v1904 = vmul.f32 %v1886, %v1816
          %v1905 = vmul.f32 %v1886, %v1819
          %v1906 = vmul.f32 %v1886, %v1821
          %v1907 = vmul.f32 %v1886, %v1824
          %v1908 = vmul.f32 %v1886, %v1826
          %v1909 = vmul.f32 %v1886, %v1829
          %v1910 = vmul.f32 %v1886, %v1831
          %v1911 = vmul.f32 %v1886, %v1834
          %v1912 = vmul.f32 %v1886, %v1836
          %v1913 = vmul.f32 %v1886, %v1839
          %v1914 = vmul.f32 %v1886, %v1841
          %v1915 = vmul.f32 %v1886, %v1844
          %v1916 = vmul.f32 %v1886, %v1846
          %v1917 = vmul.f32 %v1886, %v1849
          %v1918 = vmul.f32 %v1886, %v1851
          %v1919 = vmax.f32 %v1887, 0.0
          %v1920 = vmax.f32 %v1888, 0.0
          %v1921 = vmax.f32 %v1889, 0.0
          %v1922 = vmax.f32 %v1890, 0.0
          %v1923 = vmax.f32 %v1891, 0.0
          %v1924 = vmax.f32 %v1892, 0.0
          %v1925 = vmax.f32 %v1893, 0.0
          %v1926 = vmax.f32 %v1894, 0.0
          %v1927 = vmax.f32 %v1895, 0.0
          %v1928 = vmax.f32 %v1896, 0.0
          %v1929 = vmax.f32 %v1897, 0.0
          %v1930 = vmax.f32 %v1898, 0.0
          %v1931 = vmax.f32 %v1899, 0.0
          %v1932 = vmax.f32 %v1900, 0.0
          %v1933 = vmax.f32 %v1901, 0.0
          %v1934 = vmax.f32 %v1902, 0.0
          %v1935 = vmax.f32 %v1903, 0.0
          %v1936 = vmax.f32 %v1904, 0.0
          %v1937 = vmax.f32 %v1905, 0.0
          %v1938 = vmax.f32 %v1906, 0.0
          %v1939 = vmax.f32 %v1907, 0.0
          %v1940 = vmax.f32 %v1908, 0.0
          %v1941 = vmax.f32 %v1909, 0.0
          %v1942 = vmax.f32 %v1910, 0.0
          %v1943 = vmax.f32 %v1911, 0.0
          %v1944 = vmax.f32 %v1912, 0.0
          %v1945 = vmax.f32 %v1913, 0.0
          %v1946 = vmax.f32 %v1914, 0.0
          %v1947 = vmax.f32 %v1915, 0.0
          %v1948 = vmax.f32 %v1916, 0.0
          %v1949 = vmax.f32 %v1917, 0.0
          %v1950 = vmax.f32 %v1918, 0.0
          %v1951 = vadd.f32 %v1853, %v1919
          %v1952 = vadd.f32 %v1854, %v1920
          %v1953 = vadd.f32 %v1855, %v1921
          %v1954 = vadd.f32 %v1856, %v1922
          %v1955 = vadd.f32 %v1857, %v1923
          %v1956 = vadd.f32 %v1858, %v1924
          %v1957 = vadd.f32 %v1859, %v1925
          %v1958 = vadd.f32 %v1860, %v1926
          %v1959 = vadd.f32 %v1861, %v1927
          %v1960 = vadd.f32 %v1862, %v1928
          %v1961 = vadd.f32 %v1863, %v1929
          %v1962 = vadd.f32 %v1864, %v1930
          %v1963 = vadd.f32 %v1865, %v1931
          %v1964 = vadd.f32 %v1866, %v1932
          %v1965 = vadd.f32 %v1867, %v1933
          %v1966 = vadd.f32 %v1868, %v1934
          %v1967 = vadd.f32 %v1869, %v1935
          %v1968 = vadd.f32 %v1870, %v1936
          %v1969 = vadd.f32 %v1871, %v1937
          %v1970 = vadd.f32 %v1872, %v1938
          %v1971 = vadd.f32 %v1873, %v1939
          %v1972 = vadd.f32 %v1874, %v1940
          %v1973 = vadd.f32 %v1875, %v1941
          %v1974 = vadd.f32 %v1876, %v1942
          %v1975 = vadd.f32 %v1877, %v1943
          %v1976 = vadd.f32 %v1878, %v1944
          %v1977 = vadd.f32 %v1879, %v1945
          %v1978 = vadd.f32 %v1880, %v1946
          %v1979 = vadd.f32 %v1881, %v1947
          %v1980 = vadd.f32 %v1882, %v1948
          %v1981 = vadd.f32 %v1883, %v1949
          %v1982 = vadd.f32 %v1884, %v1950
          %1983 = vst [vmem:[%s509] sm:$0xff] %v1951
          %1984 = vst [vmem:[%s509 + $0x8] sm:$0xff] %v1952
          %1985 = vst [vmem:[%s509 + $0x10] sm:$0xff] %v1953
          %1986 = vst [vmem:[%s509 + $0x18] sm:$0xff] %v1954
          %1987 = vst [vmem:[%s509 + $0x20] sm:$0xff] %v1955
          %1988 = vst [vmem:[%s509 + $0x28] sm:$0xff] %v1956
          %1989 = vst [vmem:[%s509 + $0x30] sm:$0xff] %v1957
          %1990 = vst [vmem:[%s509 + $0x38] sm:$0xff] %v1958
          %1991 = vst [vmem:[%s509 + $0x40] sm:$0xff] %v1959
          %1992 = vst [vmem:[%s509 + $0x48] sm:$0xff] %v1960
          %1993 = vst [vmem:[%s509 + $0x50] sm:$0xff] %v1961
          %1994 = vst [vmem:[%s509 + $0x58] sm:$0xff] %v1962
          %1995 = vst [vmem:[%s509 + $0x60] sm:$0xff] %v1963
          %1996 = vst [vmem:[%s509 + $0x68] sm:$0xff] %v1964
          %1997 = vst [vmem:[%s509 + $0x70] sm:$0xff] %v1965
          %1998 = vst [vmem:[%s509 + $0x78] sm:$0xff] %v1966
          %1999 = vst [vmem:[%s509 + $0x80] sm:$0xff] %v1967
          %2000 = vst [vmem:[%s509 + $0x88] sm:$0xff] %v1968
          %2001 = vst [vmem:[%s509 + $0x90] sm:$0xff] %v1969
          %2002 = vst [vmem:[%s509 + $0x98] sm:$0xff] %v1970
          %2003 = vst [vmem:[%s509 + $0xa0] sm:$0xff] %v1971
          %2004 = vst [vmem:[%s509 + $0xa8] sm:$0xff] %v1972
          %2005 = vst [vmem:[%s509 + $0xb0] sm:$0xff] %v1973
          %2006 = vst [vmem:[%s509 + $0xb8] sm:$0xff] %v1974
          %2007 = vst [vmem:[%s509 + $0xc0] sm:$0xff] %v1975
          %2008 = vst [vmem:[%s509 + $0xc8] sm:$0xff] %v1976
          %2009 = vst [vmem:[%s509 + $0xd0] sm:$0xff] %v1977
          %2010 = vst [vmem:[%s509 + $0xd8] sm:$0xff] %v1978
          %2011 = vst [vmem:[%s509 + $0xe0] sm:$0xff] %v1979
          %2012 = vst [vmem:[%s509 + $0xe8] sm:$0xff] %v1980
          %2013 = vst [vmem:[%s509 + $0xf0] sm:$0xff] %v1981
          %2014 = vst [vmem:[%s509 + $0xf8] sm:$0xff] %v1982
        $region79: #{drew_gnn_stage.1} parent=62 // pred_fallthru
          _
        %s2015 = smul.u32 32, %s37
        %p2016 = scmp.lt.s32.totalorder %s2015, 127
        %s2017 = scalar_select %p2016, %s2015, 127
        %s2018 = smul.addr %s2017, 8
        %s2019 = scalar_lea.vmem %s8, %s2018
        // Predicated region
        $region80: #{drew_gnn_stage.1} parent=62 // pred_check
          %p2020 = pneg %p218
        $region81: #{drew_gnn_stage.1} parent=62 // pred_check_branch
          %2022 = sbr.rel (%p2020) target = $region83
        $region82: #{drew_gnn_stage.1} parent=62 // pred_region
          %s2023 = smul.u32 32, %s37
        $region83: #{drew_gnn_stage.1} parent=62 // pred_fallthru
          _
      $region63: #{drew_gnn_stage.1} parent=5 // pred_fallthru
        _
      %p2024 = scmp.le.s32.totalorder 2, %s28
      // Predicated region
      $region84: #{drew_gnn_stage.1} parent=5 // pred_check
        %p2025 = pneg %p2024
      $region85: #{drew_gnn_stage.1} parent=5 // pred_check_branch
        %2027 = sbr.rel (%p2025) target = $region87
      $region86: #{drew_gnn_stage.1} parent=5 // pred_region
        %s2028 = ssub.s32 %s28, 2
        // Predicated region
        $region88: #{drew_gnn_stage.1} parent=86 // pred_check
          %p2029 = pneg %p224
        $region89: #{drew_gnn_stage.1} parent=86 // pred_check_branch
          %2031 = sbr.rel (%p2029) target = $region91
        $region90: #{drew_gnn_stage.1} parent=86 // pred_region
          %s2032 = smul.u32 32, %s39
          %p2033 = scmp.lt.s32.totalorder %s2032, 127
          %s2034 = scalar_select %p2033, %s2032, 127
          %s2035 = smul.addr %s2034, 8
          %s2036 = scalar_lea.vmem %s8, %s2035
        $region91: #{drew_gnn_stage.1} parent=86 // pred_fallthru
          _
      $region87: #{drew_gnn_stage.1} parent=5 // pred_fallthru
        _
    $region6: #{drew_gnn_stage.1} parent=1 // loop_footer
      %s32 = sadd.s32 1, %s28
    $region7: #{drew_gnn_stage.1} parent=1 // loop_footer_branch
      %27 = sbr.rel target = $region3
    $region8: #{drew_gnn_stage.1} parent=1 // loop_exit
      _

</llo_original>
